<compile_context>
chip_gen: v7x
topology: tpu7x:2x2x1
jax: 0.10.0
libtpu: 0.0.40
codegen_flags: <defaults>
</compile_context>

<pallas_src>
import jax
import jax.numpy as jnp
from jax.experimental import pallas as pl
from jax.experimental.pallas import tpu as pltpu


def _upsample_block_kernel(x_ref, w_ref, shift_ref, hmat_ref, wmatT_ref, o_ref, ybuf):
    # x_ref:     (1, Cin, H, W)   VMEM  input tile (NCHW slice, lane dim = W)
    # w_ref:     (Cout*Cin,)      SMEM  BN-scale-folded 1x1 conv weight, flattened (f32)
    # shift_ref: (Cout,)          SMEM  folded BN shift: beta - mean*scale (f32)
    # hmat_ref:  (Ho, H)          VMEM  height interpolation matrix (grid-invariant)
    # wmatT_ref: (W, Wo)          VMEM  transposed width interpolation matrix (grid-invariant)
    # o_ref:     (1, Cb, Ho, Wo)  VMEM  output tile (NCHW slice, lane dim = Wo)
    # ybuf:      (Cb*H, W)        VMEM  scratch: post-ReLU maps stacked along sublanes
    cb = o_ref.shape[1]
    cin = x_ref.shape[1]
    H = x_ref.shape[2]
    c0 = pl.program_id(1) * cb                       # global output-channel offset

    # Hoisted grid-invariant reads (read once, reuse across the channel loop).
    hmat = hmat_ref[...]                             # (Ho, H)
    wmatT = wmatT_ref[...]                           # (W, Wo)
    xs = [x_ref[0, ci] for ci in range(cin)]         # each input plane read exactly once

    # 1x1 conv as VPU scalar-FMA over Cin (BN scale already folded into w),
    # then BN shift + ReLU; stack the cb results along sublanes in ybuf.
    for c in range(cb):                              # static unroll (small channel block)
        w_base = (c0 + c) * cin
        acc = xs[0] * w_ref[w_base]
        for ci in range(1, cin):
            acc = acc + xs[ci] * w_ref[w_base + ci]
        yc = jnp.maximum(acc + shift_ref[c0 + c], 0.0)          # (H, W)
        ybuf[pl.ds(c * H, H), :] = yc

    # Separable align_corners=True bilinear upsample.
    # Width interpolation for ALL channels of the block in one MXU matmul.
    t = jnp.dot(ybuf[...], wmatT, preferred_element_type=jnp.float32)      # (cb*H, Wo)

    # Height interpolation per channel; store straight into the NCHW output tile.
    for c in range(cb):
        tc = t[c * H:(c + 1) * H, :]                                        # (H, Wo)
        o_ref[0, c] = jnp.dot(hmat, tc,
                              preferred_element_type=jnp.float32).astype(o_ref.dtype)


def _interp_matrix(n_in, n_out):
    """Rows = output index, cols = input index; PyTorch bilinear align_corners=True."""
    if n_in == 1:
        return jnp.ones((n_out, 1), jnp.float32)
    src = jnp.arange(n_out, dtype=jnp.float32) * (n_in - 1) / (n_out - 1)
    i0 = jnp.clip(jnp.floor(src).astype(jnp.int32), 0, n_in - 2)
    frac = src - i0.astype(jnp.float32)
    rows = jnp.arange(n_out)
    m = jnp.zeros((n_out, n_in), jnp.float32)
    m = m.at[rows, i0].add(1.0 - frac)
    m = m.at[rows, i0 + 1].add(frac)
    return m


def upsample_block(x_nchw, conv_w, gamma, beta, run_mean, run_var, stride=2, eps=1e-5):
    N, Cin, H, W = x_nchw.shape
    Cout = conv_w.shape[0]
    Ho, Wo = H * stride, W * stride

    # Fold BN (eval) into the 1x1 conv: scale goes into the weight, keep only the shift.
    scale = (gamma / jnp.sqrt(run_var + eps)).astype(jnp.float32)                 # (Cout,)
    w_folded = (conv_w[:, :, 0, 0].astype(jnp.float32) * scale[:, None]).reshape(-1)  # (Cout*Cin,)
    shift = (beta - run_mean * scale).astype(jnp.float32)                         # (Cout,)

    # Separable align_corners=True interpolation matrices (KB-sized, grid-invariant).
    hmat = _interp_matrix(H, Ho)            # (Ho, H)
    wmat_t = _interp_matrix(W, Wo).T        # (W, Wo)

    # Channel block: biggest divisor of Cout whose output tile (double-buffered) + scratch
    # stay well inside the VMEM budget (lane dim padded to 128 in the estimate).
    budget = 6 * 1024 * 1024

    def _cost(cb):
        return 2 * cb * Ho * max(Wo, 128) * 4 + cb * H * max(W, 128) * 4

    c_blk = 1
    for d in (32, 16, 8, 4, 2, 1):
        if Cout % d == 0 and _cost(d) <= budget:
            c_blk = d
            break
    grid = (N, Cout // c_blk)

    out = pl.pallas_call(
        _upsample_block_kernel,
        out_shape=jax.ShapeDtypeStruct((N, Cout, Ho, Wo), x_nchw.dtype),
        grid_spec=pltpu.PrefetchScalarGridSpec(
            num_scalar_prefetch=0,
            grid=grid,
            in_specs=[
                pl.BlockSpec((1, Cin, H, W), lambda n, cj: (n, 0, 0, 0)),      # x (NCHW)
                pl.BlockSpec(memory_space=pltpu.MemorySpace.SMEM),             # w_folded (1-D)
                pl.BlockSpec(memory_space=pltpu.MemorySpace.SMEM),             # shift (1-D)
                pl.BlockSpec((Ho, H), lambda n, cj: (0, 0)),                   # hmat (invariant)
                pl.BlockSpec((W, Wo), lambda n, cj: (0, 0)),                   # wmat_t (invariant)
            ],
            out_specs=pl.BlockSpec((1, c_blk, Ho, Wo), lambda n, cj: (n, cj, 0, 0)),
            scratch_shapes=[pltpu.VMEM((c_blk * H, W), jnp.float32)],
        ),
        compiler_params=pltpu.CompilerParams(
            dimension_semantics=("parallel", "parallel"),
            vmem_limit_bytes=32 * 1024 * 1024,
        ),
    )(x_nchw, w_folded, shift, hmat, wmat_t)

    return out  # NCHW: (N, Cout, Ho, Wo); no wrapper transposes / extra HBM passes


def _reference(x, conv_w, gamma, beta, rm, rv, stride=2, eps=1e-5):
    # Pure-JAX reference with identical math (sanity check).
    N, Cin, H, W = x.shape
    y = jnp.einsum('nchw,oc->nohw', x, conv_w[:, :, 0, 0])
    scale = gamma / jnp.sqrt(rv + eps)
    y = y * scale[None, :, None, None] + (beta - rm * scale)[None, :, None, None]
    y = jnp.maximum(y, 0.0)
    Hm = _interp_matrix(H, H * stride)
    Wm = _interp_matrix(W, W * stride)
    return jnp.einsum('ph,qw,nchw->ncpq', Hm, Wm, y)


if __name__ == "__main__":
    key = jax.random.PRNGKey(0)
    k_x, k_w, k_g, k_b, k_m, k_v = jax.random.split(key, 6)

    N, Cin, Cout, H, W, stride = 2, 4, 8, 16, 16, 2

    x = jax.random.normal(k_x, (N, Cin, H, W), jnp.float32)
    conv_w = jax.random.normal(k_w, (Cout, Cin, 1, 1), jnp.float32) * 0.1   # Conv2d weight (bias=False)
    gamma = 1.0 + 0.1 * jax.random.normal(k_g, (Cout,), jnp.float32)        # BN weight
    beta = 0.1 * jax.random.normal(k_b, (Cout,), jnp.float32)               # BN bias
    run_mean = 0.1 * jax.random.normal(k_m, (Cout,), jnp.float32)           # BN running_mean
    run_var = 0.5 + jnp.abs(jax.random.normal(k_v, (Cout,), jnp.float32))   # BN running_var

    out = upsample_block(x, conv_w, gamma, beta, run_mean, run_var, stride=stride)
    out = jax.block_until_ready(out)

    ref = _reference(x, conv_w, gamma, beta, run_mean, run_var, stride=stride)
    assert out.shape == (N, Cout, H * stride, W * stride), out.shape
    assert jnp.allclose(out, ref, atol=1e-3, rtol=1e-3), float(jnp.max(jnp.abs(out - ref)))

    print("KERNEL_OK")
</pallas_src>

<mosaic_0001>
module attributes {stable_mosaic.version = 11 : i64} {
  func.func @_upsample_block_kernel(%arg0: i32, %arg1: i32, %arg2: memref<1x4x16x16xf32, #tpu.memory_space<vmem>>, %arg3: memref<32xf32, #tpu.memory_space<smem>>, %arg4: memref<8xf32, #tpu.memory_space<smem>>, %arg5: memref<32x16xf32, #tpu.memory_space<vmem>>, %arg6: memref<16x32xf32, #tpu.memory_space<vmem>>, %arg7: memref<1x8x32x32xf32, #tpu.memory_space<vmem>>, %arg8: memref<128x16xf32, #tpu.memory_space<vmem>>) attributes {dimension_semantics = [#tpu.dimension_semantics<parallel>, #tpu.dimension_semantics<parallel>], iteration_bounds = array<i64: 2, 1>, scalar_prefetch = 0 : i64, scratch_operands = 1 : i64, tpu.core_type = #tpu.core_type<tc>, window_params = [{transform_indices = @transform_0, window_bounds = array<i64: 1, 4, 16, 16>}, {transform_indices = @transform_1, window_bounds = array<i64: 32>}, {transform_indices = @transform_2, window_bounds = array<i64: 8>}, {pipeline_mode = #tpu.pipeline_mode<synchronous>, transform_indices = @transform_3, window_bounds = array<i64: 32, 16>}, {pipeline_mode = #tpu.pipeline_mode<synchronous>, transform_indices = @transform_4, window_bounds = array<i64: 16, 32>}, {transform_indices = @transform_5, window_bounds = array<i64: 1, 8, 32, 32>}]} {
    %c8_i32 = arith.constant 8 : i32
    %0 = arith.muli %arg1, %c8_i32 : i32
    %c0 = arith.constant 0 : index
    %c0_0 = arith.constant 0 : index
    %1 = vector.load %arg5[%c0, %c0_0] : memref<32x16xf32, #tpu.memory_space<vmem>>, vector<32x16xf32>
    %c0_1 = arith.constant 0 : index
    %c0_2 = arith.constant 0 : index
    %2 = vector.load %arg6[%c0_1, %c0_2] : memref<16x32xf32, #tpu.memory_space<vmem>>, vector<16x32xf32>
    %c0_3 = arith.constant 0 : index
    %c0_4 = arith.constant 0 : index
    %c0_5 = arith.constant 0 : index
    %c0_6 = arith.constant 0 : index
    %3 = vector.load %arg2[%c0_3, %c0_4, %c0_5, %c0_6] : memref<1x4x16x16xf32, #tpu.memory_space<vmem>>, vector<1x1x16x16xf32>
    %4 = vector.shape_cast %3 : vector<1x1x16x16xf32> to vector<16x16xf32>
    %c0_7 = arith.constant 0 : index
    %c1 = arith.constant 1 : index
    %c0_8 = arith.constant 0 : index
    %c0_9 = arith.constant 0 : index
    %5 = vector.load %arg2[%c0_7, %c1, %c0_8, %c0_9] : memref<1x4x16x16xf32, #tpu.memory_space<vmem>>, vector<1x1x16x16xf32>
    %6 = vector.shape_cast %5 : vector<1x1x16x16xf32> to vector<16x16xf32>
    %c0_10 = arith.constant 0 : index
    %c2 = arith.constant 2 : index
    %c0_11 = arith.constant 0 : index
    %c0_12 = arith.constant 0 : index
    %7 = vector.load %arg2[%c0_10, %c2, %c0_11, %c0_12] : memref<1x4x16x16xf32, #tpu.memory_space<vmem>>, vector<1x1x16x16xf32>
    %8 = vector.shape_cast %7 : vector<1x1x16x16xf32> to vector<16x16xf32>
    %c0_13 = arith.constant 0 : index
    %c3 = arith.constant 3 : index
    %c0_14 = arith.constant 0 : index
    %c0_15 = arith.constant 0 : index
    %9 = vector.load %arg2[%c0_13, %c3, %c0_14, %c0_15] : memref<1x4x16x16xf32, #tpu.memory_space<vmem>>, vector<1x1x16x16xf32>
    %10 = vector.shape_cast %9 : vector<1x1x16x16xf32> to vector<16x16xf32>
    %c0_i32 = arith.constant 0 : i32
    %11 = arith.addi %0, %c0_i32 : i32
    %c4_i32 = arith.constant 4 : i32
    %12 = arith.muli %11, %c4_i32 : i32
    %13 = arith.index_cast %12 : i32 to index
    %14 = memref.load %arg3[%13] : memref<32xf32, #tpu.memory_space<smem>>
    %15 = vector.broadcast %14 : f32 to vector<16x16xf32>
    %16 = arith.mulf %4, %15 : vector<16x16xf32>
    %c1_i32 = arith.constant 1 : i32
    %17 = arith.addi %12, %c1_i32 : i32
    %18 = arith.index_cast %17 : i32 to index
    %19 = memref.load %arg3[%18] : memref<32xf32, #tpu.memory_space<smem>>
    %20 = vector.broadcast %19 : f32 to vector<16x16xf32>
    %21 = arith.mulf %6, %20 : vector<16x16xf32>
    %22 = arith.addf %16, %21 : vector<16x16xf32>
    %c2_i32 = arith.constant 2 : i32
    %23 = arith.addi %12, %c2_i32 : i32
    %24 = arith.index_cast %23 : i32 to index
    %25 = memref.load %arg3[%24] : memref<32xf32, #tpu.memory_space<smem>>
    %26 = vector.broadcast %25 : f32 to vector<16x16xf32>
    %27 = arith.mulf %8, %26 : vector<16x16xf32>
    %28 = arith.addf %22, %27 : vector<16x16xf32>
    %c3_i32 = arith.constant 3 : i32
    %29 = arith.addi %12, %c3_i32 : i32
    %30 = arith.index_cast %29 : i32 to index
    %31 = memref.load %arg3[%30] : memref<32xf32, #tpu.memory_space<smem>>
    %32 = vector.broadcast %31 : f32 to vector<16x16xf32>
    %33 = arith.mulf %10, %32 : vector<16x16xf32>
    %34 = arith.addf %28, %33 : vector<16x16xf32>
    %c0_i32_16 = arith.constant 0 : i32
    %35 = arith.addi %0, %c0_i32_16 : i32
    %36 = arith.index_cast %35 : i32 to index
    %37 = memref.load %arg4[%36] : memref<8xf32, #tpu.memory_space<smem>>
    %38 = vector.broadcast %37 : f32 to vector<16x16xf32>
    %39 = arith.addf %34, %38 : vector<16x16xf32>
    %cst = arith.constant 0.000000e+00 : f32
    %40 = vector.broadcast %cst : f32 to vector<16x16xf32>
    %41 = arith.maximumf %39, %40 : vector<16x16xf32>
    %c0_17 = arith.constant 0 : index
    %c0_18 = arith.constant 0 : index
    %42 = vector.load %arg8[%c0_17, %c0_18] : memref<128x16xf32, #tpu.memory_space<vmem>>, vector<16x16xf32>
    tpu.vector_store %arg8[%c0_17, %c0_18], %41 {strides = array<i32>} : memref<128x16xf32, #tpu.memory_space<vmem>>, vector<16x16xf32>,
    %c1_i32_19 = arith.constant 1 : i32
    %43 = arith.addi %0, %c1_i32_19 : i32
    %c4_i32_20 = arith.constant 4 : i32
    %44 = arith.muli %43, %c4_i32_20 : i32
    %45 = arith.index_cast %44 : i32 to index
    %46 = memref.load %arg3[%45] : memref<32xf32, #tpu.memory_space<smem>>
    %47 = vector.broadcast %46 : f32 to vector<16x16xf32>
    %48 = arith.mulf %4, %47 : vector<16x16xf32>
    %c1_i32_21 = arith.constant 1 : i32
    %49 = arith.addi %44, %c1_i32_21 : i32
    %50 = arith.index_cast %49 : i32 to index
    %51 = memref.load %arg3[%50] : memref<32xf32, #tpu.memory_space<smem>>
    %52 = vector.broadcast %51 : f32 to vector<16x16xf32>
    %53 = arith.mulf %6, %52 : vector<16x16xf32>
    %54 = arith.addf %48, %53 : vector<16x16xf32>
    %c2_i32_22 = arith.constant 2 : i32
    %55 = arith.addi %44, %c2_i32_22 : i32
    %56 = arith.index_cast %55 : i32 to index
    %57 = memref.load %arg3[%56] : memref<32xf32, #tpu.memory_space<smem>>
    %58 = vector.broadcast %57 : f32 to vector<16x16xf32>
    %59 = arith.mulf %8, %58 : vector<16x16xf32>
    %60 = arith.addf %54, %59 : vector<16x16xf32>
    %c3_i32_23 = arith.constant 3 : i32
    %61 = arith.addi %44, %c3_i32_23 : i32
    %62 = arith.index_cast %61 : i32 to index
    %63 = memref.load %arg3[%62] : memref<32xf32, #tpu.memory_space<smem>>
    %64 = vector.broadcast %63 : f32 to vector<16x16xf32>
    %65 = arith.mulf %10, %64 : vector<16x16xf32>
    %66 = arith.addf %60, %65 : vector<16x16xf32>
    %c1_i32_24 = arith.constant 1 : i32
    %67 = arith.addi %0, %c1_i32_24 : i32
    %68 = arith.index_cast %67 : i32 to index
    %69 = memref.load %arg4[%68] : memref<8xf32, #tpu.memory_space<smem>>
    %70 = vector.broadcast %69 : f32 to vector<16x16xf32>
    %71 = arith.addf %66, %70 : vector<16x16xf32>
    %cst_25 = arith.constant 0.000000e+00 : f32
    %72 = vector.broadcast %cst_25 : f32 to vector<16x16xf32>
    %73 = arith.maximumf %71, %72 : vector<16x16xf32>
    %c16 = arith.constant 16 : index
    %c0_26 = arith.constant 0 : index
    %74 = vector.load %arg8[%c16, %c0_26] : memref<128x16xf32, #tpu.memory_space<vmem>>, vector<16x16xf32>
    tpu.vector_store %arg8[%c16, %c0_26], %73 {strides = array<i32>} : memref<128x16xf32, #tpu.memory_space<vmem>>, vector<16x16xf32>,
    %c2_i32_27 = arith.constant 2 : i32
    %75 = arith.addi %0, %c2_i32_27 : i32
    %c4_i32_28 = arith.constant 4 : i32
    %76 = arith.muli %75, %c4_i32_28 : i32
    %77 = arith.index_cast %76 : i32 to index
    %78 = memref.load %arg3[%77] : memref<32xf32, #tpu.memory_space<smem>>
    %79 = vector.broadcast %78 : f32 to vector<16x16xf32>
    %80 = arith.mulf %4, %79 : vector<16x16xf32>
    %c1_i32_29 = arith.constant 1 : i32
    %81 = arith.addi %76, %c1_i32_29 : i32
    %82 = arith.index_cast %81 : i32 to index
    %83 = memref.load %arg3[%82] : memref<32xf32, #tpu.memory_space<smem>>
    %84 = vector.broadcast %83 : f32 to vector<16x16xf32>
    %85 = arith.mulf %6, %84 : vector<16x16xf32>
    %86 = arith.addf %80, %85 : vector<16x16xf32>
    %c2_i32_30 = arith.constant 2 : i32
    %87 = arith.addi %76, %c2_i32_30 : i32
    %88 = arith.index_cast %87 : i32 to index
    %89 = memref.load %arg3[%88] : memref<32xf32, #tpu.memory_space<smem>>
    %90 = vector.broadcast %89 : f32 to vector<16x16xf32>
    %91 = arith.mulf %8, %90 : vector<16x16xf32>
    %92 = arith.addf %86, %91 : vector<16x16xf32>
    %c3_i32_31 = arith.constant 3 : i32
    %93 = arith.addi %76, %c3_i32_31 : i32
    %94 = arith.index_cast %93 : i32 to index
    %95 = memref.load %arg3[%94] : memref<32xf32, #tpu.memory_space<smem>>
    %96 = vector.broadcast %95 : f32 to vector<16x16xf32>
    %97 = arith.mulf %10, %96 : vector<16x16xf32>
    %98 = arith.addf %92, %97 : vector<16x16xf32>
    %c2_i32_32 = arith.constant 2 : i32
    %99 = arith.addi %0, %c2_i32_32 : i32
    %100 = arith.index_cast %99 : i32 to index
    %101 = memref.load %arg4[%100] : memref<8xf32, #tpu.memory_space<smem>>
    %102 = vector.broadcast %101 : f32 to vector<16x16xf32>
    %103 = arith.addf %98, %102 : vector<16x16xf32>
    %cst_33 = arith.constant 0.000000e+00 : f32
    %104 = vector.broadcast %cst_33 : f32 to vector<16x16xf32>
    %105 = arith.maximumf %103, %104 : vector<16x16xf32>
    %c32 = arith.constant 32 : index
    %c0_34 = arith.constant 0 : index
    %106 = vector.load %arg8[%c32, %c0_34] : memref<128x16xf32, #tpu.memory_space<vmem>>, vector<16x16xf32>
    tpu.vector_store %arg8[%c32, %c0_34], %105 {strides = array<i32>} : memref<128x16xf32, #tpu.memory_space<vmem>>, vector<16x16xf32>,
    %c3_i32_35 = arith.constant 3 : i32
    %107 = arith.addi %0, %c3_i32_35 : i32
    %c4_i32_36 = arith.constant 4 : i32
    %108 = arith.muli %107, %c4_i32_36 : i32
    %109 = arith.index_cast %108 : i32 to index
    %110 = memref.load %arg3[%109] : memref<32xf32, #tpu.memory_space<smem>>
    %111 = vector.broadcast %110 : f32 to vector<16x16xf32>
    %112 = arith.mulf %4, %111 : vector<16x16xf32>
    %c1_i32_37 = arith.constant 1 : i32
    %113 = arith.addi %108, %c1_i32_37 : i32
    %114 = arith.index_cast %113 : i32 to index
    %115 = memref.load %arg3[%114] : memref<32xf32, #tpu.memory_space<smem>>
    %116 = vector.broadcast %115 : f32 to vector<16x16xf32>
    %117 = arith.mulf %6, %116 : vector<16x16xf32>
    %118 = arith.addf %112, %117 : vector<16x16xf32>
    %c2_i32_38 = arith.constant 2 : i32
    %119 = arith.addi %108, %c2_i32_38 : i32
    %120 = arith.index_cast %119 : i32 to index
    %121 = memref.load %arg3[%120] : memref<32xf32, #tpu.memory_space<smem>>
    %122 = vector.broadcast %121 : f32 to vector<16x16xf32>
    %123 = arith.mulf %8, %122 : vector<16x16xf32>
    %124 = arith.addf %118, %123 : vector<16x16xf32>
    %c3_i32_39 = arith.constant 3 : i32
    %125 = arith.addi %108, %c3_i32_39 : i32
    %126 = arith.index_cast %125 : i32 to index
    %127 = memref.load %arg3[%126] : memref<32xf32, #tpu.memory_space<smem>>
    %128 = vector.broadcast %127 : f32 to vector<16x16xf32>
    %129 = arith.mulf %10, %128 : vector<16x16xf32>
    %130 = arith.addf %124, %129 : vector<16x16xf32>
    %c3_i32_40 = arith.constant 3 : i32
    %131 = arith.addi %0, %c3_i32_40 : i32
    %132 = arith.index_cast %131 : i32 to index
    %133 = memref.load %arg4[%132] : memref<8xf32, #tpu.memory_space<smem>>
    %134 = vector.broadcast %133 : f32 to vector<16x16xf32>
    %135 = arith.addf %130, %134 : vector<16x16xf32>
    %cst_41 = arith.constant 0.000000e+00 : f32
    %136 = vector.broadcast %cst_41 : f32 to vector<16x16xf32>
    %137 = arith.maximumf %135, %136 : vector<16x16xf32>
    %c48 = arith.constant 48 : index
    %c0_42 = arith.constant 0 : index
    %138 = vector.load %arg8[%c48, %c0_42] : memref<128x16xf32, #tpu.memory_space<vmem>>, vector<16x16xf32>
    tpu.vector_store %arg8[%c48, %c0_42], %137 {strides = array<i32>} : memref<128x16xf32, #tpu.memory_space<vmem>>, vector<16x16xf32>,
    %c4_i32_43 = arith.constant 4 : i32
    %139 = arith.addi %0, %c4_i32_43 : i32
    %c4_i32_44 = arith.constant 4 : i32
    %140 = arith.muli %139, %c4_i32_44 : i32
    %141 = arith.index_cast %140 : i32 to index
    %142 = memref.load %arg3[%141] : memref<32xf32, #tpu.memory_space<smem>>
    %143 = vector.broadcast %142 : f32 to vector<16x16xf32>
    %144 = arith.mulf %4, %143 : vector<16x16xf32>
    %c1_i32_45 = arith.constant 1 : i32
    %145 = arith.addi %140, %c1_i32_45 : i32
    %146 = arith.index_cast %145 : i32 to index
    %147 = memref.load %arg3[%146] : memref<32xf32, #tpu.memory_space<smem>>
    %148 = vector.broadcast %147 : f32 to vector<16x16xf32>
    %149 = arith.mulf %6, %148 : vector<16x16xf32>
    %150 = arith.addf %144, %149 : vector<16x16xf32>
    %c2_i32_46 = arith.constant 2 : i32
    %151 = arith.addi %140, %c2_i32_46 : i32
    %152 = arith.index_cast %151 : i32 to index
    %153 = memref.load %arg3[%152] : memref<32xf32, #tpu.memory_space<smem>>
    %154 = vector.broadcast %153 : f32 to vector<16x16xf32>
    %155 = arith.mulf %8, %154 : vector<16x16xf32>
    %156 = arith.addf %150, %155 : vector<16x16xf32>
    %c3_i32_47 = arith.constant 3 : i32
    %157 = arith.addi %140, %c3_i32_47 : i32
    %158 = arith.index_cast %157 : i32 to index
    %159 = memref.load %arg3[%158] : memref<32xf32, #tpu.memory_space<smem>>
    %160 = vector.broadcast %159 : f32 to vector<16x16xf32>
    %161 = arith.mulf %10, %160 : vector<16x16xf32>
    %162 = arith.addf %156, %161 : vector<16x16xf32>
    %c4_i32_48 = arith.constant 4 : i32
    %163 = arith.addi %0, %c4_i32_48 : i32
    %164 = arith.index_cast %163 : i32 to index
    %165 = memref.load %arg4[%164] : memref<8xf32, #tpu.memory_space<smem>>
    %166 = vector.broadcast %165 : f32 to vector<16x16xf32>
    %167 = arith.addf %162, %166 : vector<16x16xf32>
    %cst_49 = arith.constant 0.000000e+00 : f32
    %168 = vector.broadcast %cst_49 : f32 to vector<16x16xf32>
    %169 = arith.maximumf %167, %168 : vector<16x16xf32>
    %c64 = arith.constant 64 : index
    %c0_50 = arith.constant 0 : index
    %170 = vector.load %arg8[%c64, %c0_50] : memref<128x16xf32, #tpu.memory_space<vmem>>, vector<16x16xf32>
    tpu.vector_store %arg8[%c64, %c0_50], %169 {strides = array<i32>} : memref<128x16xf32, #tpu.memory_space<vmem>>, vector<16x16xf32>,
    %c5_i32 = arith.constant 5 : i32
    %171 = arith.addi %0, %c5_i32 : i32
    %c4_i32_51 = arith.constant 4 : i32
    %172 = arith.muli %171, %c4_i32_51 : i32
    %173 = arith.index_cast %172 : i32 to index
    %174 = memref.load %arg3[%173] : memref<32xf32, #tpu.memory_space<smem>>
    %175 = vector.broadcast %174 : f32 to vector<16x16xf32>
    %176 = arith.mulf %4, %175 : vector<16x16xf32>
    %c1_i32_52 = arith.constant 1 : i32
    %177 = arith.addi %172, %c1_i32_52 : i32
    %178 = arith.index_cast %177 : i32 to index
    %179 = memref.load %arg3[%178] : memref<32xf32, #tpu.memory_space<smem>>
    %180 = vector.broadcast %179 : f32 to vector<16x16xf32>
    %181 = arith.mulf %6, %180 : vector<16x16xf32>
    %182 = arith.addf %176, %181 : vector<16x16xf32>
    %c2_i32_53 = arith.constant 2 : i32
    %183 = arith.addi %172, %c2_i32_53 : i32
    %184 = arith.index_cast %183 : i32 to index
    %185 = memref.load %arg3[%184] : memref<32xf32, #tpu.memory_space<smem>>
    %186 = vector.broadcast %185 : f32 to vector<16x16xf32>
    %187 = arith.mulf %8, %186 : vector<16x16xf32>
    %188 = arith.addf %182, %187 : vector<16x16xf32>
    %c3_i32_54 = arith.constant 3 : i32
    %189 = arith.addi %172, %c3_i32_54 : i32
    %190 = arith.index_cast %189 : i32 to index
    %191 = memref.load %arg3[%190] : memref<32xf32, #tpu.memory_space<smem>>
    %192 = vector.broadcast %191 : f32 to vector<16x16xf32>
    %193 = arith.mulf %10, %192 : vector<16x16xf32>
    %194 = arith.addf %188, %193 : vector<16x16xf32>
    %c5_i32_55 = arith.constant 5 : i32
    %195 = arith.addi %0, %c5_i32_55 : i32
    %196 = arith.index_cast %195 : i32 to index
    %197 = memref.load %arg4[%196] : memref<8xf32, #tpu.memory_space<smem>>
    %198 = vector.broadcast %197 : f32 to vector<16x16xf32>
    %199 = arith.addf %194, %198 : vector<16x16xf32>
    %cst_56 = arith.constant 0.000000e+00 : f32
    %200 = vector.broadcast %cst_56 : f32 to vector<16x16xf32>
    %201 = arith.maximumf %199, %200 : vector<16x16xf32>
    %c80 = arith.constant 80 : index
    %c0_57 = arith.constant 0 : index
    %202 = vector.load %arg8[%c80, %c0_57] : memref<128x16xf32, #tpu.memory_space<vmem>>, vector<16x16xf32>
    tpu.vector_store %arg8[%c80, %c0_57], %201 {strides = array<i32>} : memref<128x16xf32, #tpu.memory_space<vmem>>, vector<16x16xf32>,
    %c6_i32 = arith.constant 6 : i32
    %203 = arith.addi %0, %c6_i32 : i32
    %c4_i32_58 = arith.constant 4 : i32
    %204 = arith.muli %203, %c4_i32_58 : i32
    %205 = arith.index_cast %204 : i32 to index
    %206 = memref.load %arg3[%205] : memref<32xf32, #tpu.memory_space<smem>>
    %207 = vector.broadcast %206 : f32 to vector<16x16xf32>
    %208 = arith.mulf %4, %207 : vector<16x16xf32>
    %c1_i32_59 = arith.constant 1 : i32
    %209 = arith.addi %204, %c1_i32_59 : i32
    %210 = arith.index_cast %209 : i32 to index
    %211 = memref.load %arg3[%210] : memref<32xf32, #tpu.memory_space<smem>>
    %212 = vector.broadcast %211 : f32 to vector<16x16xf32>
    %213 = arith.mulf %6, %212 : vector<16x16xf32>
    %214 = arith.addf %208, %213 : vector<16x16xf32>
    %c2_i32_60 = arith.constant 2 : i32
    %215 = arith.addi %204, %c2_i32_60 : i32
    %216 = arith.index_cast %215 : i32 to index
    %217 = memref.load %arg3[%216] : memref<32xf32, #tpu.memory_space<smem>>
    %218 = vector.broadcast %217 : f32 to vector<16x16xf32>
    %219 = arith.mulf %8, %218 : vector<16x16xf32>
    %220 = arith.addf %214, %219 : vector<16x16xf32>
    %c3_i32_61 = arith.constant 3 : i32
    %221 = arith.addi %204, %c3_i32_61 : i32
    %222 = arith.index_cast %221 : i32 to index
    %223 = memref.load %arg3[%222] : memref<32xf32, #tpu.memory_space<smem>>
    %224 = vector.broadcast %223 : f32 to vector<16x16xf32>
    %225 = arith.mulf %10, %224 : vector<16x16xf32>
    %226 = arith.addf %220, %225 : vector<16x16xf32>
    %c6_i32_62 = arith.constant 6 : i32
    %227 = arith.addi %0, %c6_i32_62 : i32
    %228 = arith.index_cast %227 : i32 to index
    %229 = memref.load %arg4[%228] : memref<8xf32, #tpu.memory_space<smem>>
    %230 = vector.broadcast %229 : f32 to vector<16x16xf32>
    %231 = arith.addf %226, %230 : vector<16x16xf32>
    %cst_63 = arith.constant 0.000000e+00 : f32
    %232 = vector.broadcast %cst_63 : f32 to vector<16x16xf32>
    %233 = arith.maximumf %231, %232 : vector<16x16xf32>
    %c96 = arith.constant 96 : index
    %c0_64 = arith.constant 0 : index
    %234 = vector.load %arg8[%c96, %c0_64] : memref<128x16xf32, #tpu.memory_space<vmem>>, vector<16x16xf32>
    tpu.vector_store %arg8[%c96, %c0_64], %233 {strides = array<i32>} : memref<128x16xf32, #tpu.memory_space<vmem>>, vector<16x16xf32>,
    %c7_i32 = arith.constant 7 : i32
    %235 = arith.addi %0, %c7_i32 : i32
    %c4_i32_65 = arith.constant 4 : i32
    %236 = arith.muli %235, %c4_i32_65 : i32
    %237 = arith.index_cast %236 : i32 to index
    %238 = memref.load %arg3[%237] : memref<32xf32, #tpu.memory_space<smem>>
    %239 = vector.broadcast %238 : f32 to vector<16x16xf32>
    %240 = arith.mulf %4, %239 : vector<16x16xf32>
    %c1_i32_66 = arith.constant 1 : i32
    %241 = arith.addi %236, %c1_i32_66 : i32
    %242 = arith.index_cast %241 : i32 to index
    %243 = memref.load %arg3[%242] : memref<32xf32, #tpu.memory_space<smem>>
    %244 = vector.broadcast %243 : f32 to vector<16x16xf32>
    %245 = arith.mulf %6, %244 : vector<16x16xf32>
    %246 = arith.addf %240, %245 : vector<16x16xf32>
    %c2_i32_67 = arith.constant 2 : i32
    %247 = arith.addi %236, %c2_i32_67 : i32
    %248 = arith.index_cast %247 : i32 to index
    %249 = memref.load %arg3[%248] : memref<32xf32, #tpu.memory_space<smem>>
    %250 = vector.broadcast %249 : f32 to vector<16x16xf32>
    %251 = arith.mulf %8, %250 : vector<16x16xf32>
    %252 = arith.addf %246, %251 : vector<16x16xf32>
    %c3_i32_68 = arith.constant 3 : i32
    %253 = arith.addi %236, %c3_i32_68 : i32
    %254 = arith.index_cast %253 : i32 to index
    %255 = memref.load %arg3[%254] : memref<32xf32, #tpu.memory_space<smem>>
    %256 = vector.broadcast %255 : f32 to vector<16x16xf32>
    %257 = arith.mulf %10, %256 : vector<16x16xf32>
    %258 = arith.addf %252, %257 : vector<16x16xf32>
    %c7_i32_69 = arith.constant 7 : i32
    %259 = arith.addi %0, %c7_i32_69 : i32
    %260 = arith.index_cast %259 : i32 to index
    %261 = memref.load %arg4[%260] : memref<8xf32, #tpu.memory_space<smem>>
    %262 = vector.broadcast %261 : f32 to vector<16x16xf32>
    %263 = arith.addf %258, %262 : vector<16x16xf32>
    %cst_70 = arith.constant 0.000000e+00 : f32
    %264 = vector.broadcast %cst_70 : f32 to vector<16x16xf32>
    %265 = arith.maximumf %263, %264 : vector<16x16xf32>
    %c112 = arith.constant 112 : index
    %c0_71 = arith.constant 0 : index
    %266 = vector.load %arg8[%c112, %c0_71] : memref<128x16xf32, #tpu.memory_space<vmem>>, vector<16x16xf32>
    tpu.vector_store %arg8[%c112, %c0_71], %265 {strides = array<i32>} : memref<128x16xf32, #tpu.memory_space<vmem>>, vector<16x16xf32>,
    %c0_72 = arith.constant 0 : index
    %c0_73 = arith.constant 0 : index
    %267 = vector.load %arg8[%c0_72, %c0_73] : memref<128x16xf32, #tpu.memory_space<vmem>>, vector<128x16xf32>
    %cst_74 = arith.constant dense<0.000000e+00> : vector<128x32xf32>
    %268 = tpu.matmul %267, %2, %cst_74 {dimension_numbers = #tpu.dot_dimension_numbers<[1], [0], [0], [1], [0, 0, 1, 1], [], []>} : vector<128x16xf32>, vector<16x32xf32>, vector<128x32xf32> -> vector<128x32xf32>
    %269 = vector.extract_strided_slice %268 {offsets = [0, 0], sizes = [16, 32], strides = [1, 1]} : vector<128x32xf32> to vector<16x32xf32>
    %cst_75 = arith.constant dense<0.000000e+00> : vector<32x32xf32>
    %270 = tpu.matmul %1, %269, %cst_75 {dimension_numbers = #tpu.dot_dimension_numbers<[1], [0], [0], [1], [0, 0, 1, 1], [], []>} : vector<32x16xf32>, vector<16x32xf32>, vector<32x32xf32> -> vector<32x32xf32>
    %c0_76 = arith.constant 0 : index
    %c0_77 = arith.constant 0 : index
    %c0_78 = arith.constant 0 : index
    %c0_79 = arith.constant 0 : index
    %271 = vector.load %arg7[%c0_76, %c0_77, %c0_78, %c0_79] : memref<1x8x32x32xf32, #tpu.memory_space<vmem>>, vector<1x1x32x32xf32>
    %272 = vector.shape_cast %271 : vector<1x1x32x32xf32> to vector<32x32xf32>
    %273 = vector.shape_cast %270 : vector<32x32xf32> to vector<1x1x32x32xf32>
    tpu.vector_store %arg7[%c0_76, %c0_77, %c0_78, %c0_79], %273 {strides = array<i32>} : memref<1x8x32x32xf32, #tpu.memory_space<vmem>>, vector<1x1x32x32xf32>,
    %274 = vector.extract_strided_slice %268 {offsets = [16, 0], sizes = [16, 32], strides = [1, 1]} : vector<128x32xf32> to vector<16x32xf32>
    %cst_80 = arith.constant dense<0.000000e+00> : vector<32x32xf32>
    %275 = tpu.matmul %1, %274, %cst_80 {dimension_numbers = #tpu.dot_dimension_numbers<[1], [0], [0], [1], [0, 0, 1, 1], [], []>} : vector<32x16xf32>, vector<16x32xf32>, vector<32x32xf32> -> vector<32x32xf32>
    %c0_81 = arith.constant 0 : index
    %c1_82 = arith.constant 1 : index
    %c0_83 = arith.constant 0 : index
    %c0_84 = arith.constant 0 : index
    %276 = vector.load %arg7[%c0_81, %c1_82, %c0_83, %c0_84] : memref<1x8x32x32xf32, #tpu.memory_space<vmem>>, vector<1x1x32x32xf32>
    %277 = vector.shape_cast %276 : vector<1x1x32x32xf32> to vector<32x32xf32>
    %278 = vector.shape_cast %275 : vector<32x32xf32> to vector<1x1x32x32xf32>
    tpu.vector_store %arg7[%c0_81, %c1_82, %c0_83, %c0_84], %278 {strides = array<i32>} : memref<1x8x32x32xf32, #tpu.memory_space<vmem>>, vector<1x1x32x32xf32>,
    %279 = vector.extract_strided_slice %268 {offsets = [32, 0], sizes = [16, 32], strides = [1, 1]} : vector<128x32xf32> to vector<16x32xf32>
    %cst_85 = arith.constant dense<0.000000e+00> : vector<32x32xf32>
    %280 = tpu.matmul %1, %279, %cst_85 {dimension_numbers = #tpu.dot_dimension_numbers<[1], [0], [0], [1], [0, 0, 1, 1], [], []>} : vector<32x16xf32>, vector<16x32xf32>, vector<32x32xf32> -> vector<32x32xf32>
    %c0_86 = arith.constant 0 : index
    %c2_87 = arith.constant 2 : index
    %c0_88 = arith.constant 0 : index
    %c0_89 = arith.constant 0 : index
    %281 = vector.load %arg7[%c0_86, %c2_87, %c0_88, %c0_89] : memref<1x8x32x32xf32, #tpu.memory_space<vmem>>, vector<1x1x32x32xf32>
    %282 = vector.shape_cast %281 : vector<1x1x32x32xf32> to vector<32x32xf32>
    %283 = vector.shape_cast %280 : vector<32x32xf32> to vector<1x1x32x32xf32>
    tpu.vector_store %arg7[%c0_86, %c2_87, %c0_88, %c0_89], %283 {strides = array<i32>} : memref<1x8x32x32xf32, #tpu.memory_space<vmem>>, vector<1x1x32x32xf32>,
    %284 = vector.extract_strided_slice %268 {offsets = [48, 0], sizes = [16, 32], strides = [1, 1]} : vector<128x32xf32> to vector<16x32xf32>
    %cst_90 = arith.constant dense<0.000000e+00> : vector<32x32xf32>
    %285 = tpu.matmul %1, %284, %cst_90 {dimension_numbers = #tpu.dot_dimension_numbers<[1], [0], [0], [1], [0, 0, 1, 1], [], []>} : vector<32x16xf32>, vector<16x32xf32>, vector<32x32xf32> -> vector<32x32xf32>
    %c0_91 = arith.constant 0 : index
    %c3_92 = arith.constant 3 : index
    %c0_93 = arith.constant 0 : index
    %c0_94 = arith.constant 0 : index
    %286 = vector.load %arg7[%c0_91, %c3_92, %c0_93, %c0_94] : memref<1x8x32x32xf32, #tpu.memory_space<vmem>>, vector<1x1x32x32xf32>
    %287 = vector.shape_cast %286 : vector<1x1x32x32xf32> to vector<32x32xf32>
    %288 = vector.shape_cast %285 : vector<32x32xf32> to vector<1x1x32x32xf32>
    tpu.vector_store %arg7[%c0_91, %c3_92, %c0_93, %c0_94], %288 {strides = array<i32>} : memref<1x8x32x32xf32, #tpu.memory_space<vmem>>, vector<1x1x32x32xf32>,
    %289 = vector.extract_strided_slice %268 {offsets = [64, 0], sizes = [16, 32], strides = [1, 1]} : vector<128x32xf32> to vector<16x32xf32>
    %cst_95 = arith.constant dense<0.000000e+00> : vector<32x32xf32>
    %290 = tpu.matmul %1, %289, %cst_95 {dimension_numbers = #tpu.dot_dimension_numbers<[1], [0], [0], [1], [0, 0, 1, 1], [], []>} : vector<32x16xf32>, vector<16x32xf32>, vector<32x32xf32> -> vector<32x32xf32>
    %c0_96 = arith.constant 0 : index
    %c4 = arith.constant 4 : index
    %c0_97 = arith.constant 0 : index
    %c0_98 = arith.constant 0 : index
    %291 = vector.load %arg7[%c0_96, %c4, %c0_97, %c0_98] : memref<1x8x32x32xf32, #tpu.memory_space<vmem>>, vector<1x1x32x32xf32>
    %292 = vector.shape_cast %291 : vector<1x1x32x32xf32> to vector<32x32xf32>
    %293 = vector.shape_cast %290 : vector<32x32xf32> to vector<1x1x32x32xf32>
    tpu.vector_store %arg7[%c0_96, %c4, %c0_97, %c0_98], %293 {strides = array<i32>} : memref<1x8x32x32xf32, #tpu.memory_space<vmem>>, vector<1x1x32x32xf32>,
    %294 = vector.extract_strided_slice %268 {offsets = [80, 0], sizes = [16, 32], strides = [1, 1]} : vector<128x32xf32> to vector<16x32xf32>
    %cst_99 = arith.constant dense<0.000000e+00> : vector<32x32xf32>
    %295 = tpu.matmul %1, %294, %cst_99 {dimension_numbers = #tpu.dot_dimension_numbers<[1], [0], [0], [1], [0, 0, 1, 1], [], []>} : vector<32x16xf32>, vector<16x32xf32>, vector<32x32xf32> -> vector<32x32xf32>
    %c0_100 = arith.constant 0 : index
    %c5 = arith.constant 5 : index
    %c0_101 = arith.constant 0 : index
    %c0_102 = arith.constant 0 : index
    %296 = vector.load %arg7[%c0_100, %c5, %c0_101, %c0_102] : memref<1x8x32x32xf32, #tpu.memory_space<vmem>>, vector<1x1x32x32xf32>
    %297 = vector.shape_cast %296 : vector<1x1x32x32xf32> to vector<32x32xf32>
    %298 = vector.shape_cast %295 : vector<32x32xf32> to vector<1x1x32x32xf32>
    tpu.vector_store %arg7[%c0_100, %c5, %c0_101, %c0_102], %298 {strides = array<i32>} : memref<1x8x32x32xf32, #tpu.memory_space<vmem>>, vector<1x1x32x32xf32>,
    %299 = vector.extract_strided_slice %268 {offsets = [96, 0], sizes = [16, 32], strides = [1, 1]} : vector<128x32xf32> to vector<16x32xf32>
    %cst_103 = arith.constant dense<0.000000e+00> : vector<32x32xf32>
    %300 = tpu.matmul %1, %299, %cst_103 {dimension_numbers = #tpu.dot_dimension_numbers<[1], [0], [0], [1], [0, 0, 1, 1], [], []>} : vector<32x16xf32>, vector<16x32xf32>, vector<32x32xf32> -> vector<32x32xf32>
    %c0_104 = arith.constant 0 : index
    %c6 = arith.constant 6 : index
    %c0_105 = arith.constant 0 : index
    %c0_106 = arith.constant 0 : index
    %301 = vector.load %arg7[%c0_104, %c6, %c0_105, %c0_106] : memref<1x8x32x32xf32, #tpu.memory_space<vmem>>, vector<1x1x32x32xf32>
    %302 = vector.shape_cast %301 : vector<1x1x32x32xf32> to vector<32x32xf32>
    %303 = vector.shape_cast %300 : vector<32x32xf32> to vector<1x1x32x32xf32>
    tpu.vector_store %arg7[%c0_104, %c6, %c0_105, %c0_106], %303 {strides = array<i32>} : memref<1x8x32x32xf32, #tpu.memory_space<vmem>>, vector<1x1x32x32xf32>,
    %304 = vector.extract_strided_slice %268 {offsets = [112, 0], sizes = [16, 32], strides = [1, 1]} : vector<128x32xf32> to vector<16x32xf32>
    %cst_107 = arith.constant dense<0.000000e+00> : vector<32x32xf32>
    %305 = tpu.matmul %1, %304, %cst_107 {dimension_numbers = #tpu.dot_dimension_numbers<[1], [0], [0], [1], [0, 0, 1, 1], [], []>} : vector<32x16xf32>, vector<16x32xf32>, vector<32x32xf32> -> vector<32x32xf32>
    %c0_108 = arith.constant 0 : index
    %c7 = arith.constant 7 : index
    %c0_109 = arith.constant 0 : index
    %c0_110 = arith.constant 0 : index
    %306 = vector.load %arg7[%c0_108, %c7, %c0_109, %c0_110] : memref<1x8x32x32xf32, #tpu.memory_space<vmem>>, vector<1x1x32x32xf32>
    %307 = vector.shape_cast %306 : vector<1x1x32x32xf32> to vector<32x32xf32>
    %308 = vector.shape_cast %305 : vector<32x32xf32> to vector<1x1x32x32xf32>
    tpu.vector_store %arg7[%c0_108, %c7, %c0_109, %c0_110], %308 {strides = array<i32>} : memref<1x8x32x32xf32, #tpu.memory_space<vmem>>, vector<1x1x32x32xf32>,
    return
  }
  func.func @transform_0(%arg0: i32, %arg1: i32) -> (i32, i32, i32, i32) {
    %c0_i32 = arith.constant 0 : i32
    %c0_i32_0 = arith.constant 0 : i32
    %c0_i32_1 = arith.constant 0 : i32
    %c0_i32_2 = arith.constant 0 : i32
    return %arg0, %c0_i32, %c0_i32_0, %c0_i32_1 : i32, i32, i32, i32
  }
  func.func @transform_1(%arg0: i32, %arg1: i32) -> i32 {
    %c0_i32 = arith.constant 0 : i32
    %c0_i32_0 = arith.constant 0 : i32
    return %c0_i32 : i32
  }
  func.func @transform_2(%arg0: i32, %arg1: i32) -> i32 {
    %c0_i32 = arith.constant 0 : i32
    %c0_i32_0 = arith.constant 0 : i32
    return %c0_i32 : i32
  }
  func.func @transform_3(%arg0: i32, %arg1: i32) -> (i32, i32) {
    %c0_i32 = arith.constant 0 : i32
    %c0_i32_0 = arith.constant 0 : i32
    %c0_i32_1 = arith.constant 0 : i32
    return %c0_i32, %c0_i32_0 : i32, i32
  }
  func.func @transform_4(%arg0: i32, %arg1: i32) -> (i32, i32) {
    %c0_i32 = arith.constant 0 : i32
    %c0_i32_0 = arith.constant 0 : i32
    %c0_i32_1 = arith.constant 0 : i32
    return %c0_i32, %c0_i32_0 : i32, i32
  }
  func.func @transform_5(%arg0: i32, %arg1: i32) -> (i32, i32, i32, i32) {
    %c0_i32 = arith.constant 0 : i32
    %c0_i32_0 = arith.constant 0 : i32
    %c0_i32_1 = arith.constant 0 : i32
    return %arg0, %arg1, %c0_i32, %c0_i32_0 : i32, i32, i32, i32
  }
}

</mosaic_0001>

<llo_original>
// kernel: tpu_custom_call.1
$region0: #{tpu_custom_call.1}
  #allocation0 [shape = 'u32[]', space=smem, size = 0x4, offset = 0x4, fixed_abs, tag = 'smem constant byte address 0x4 - core index']
  #allocation1 [shape = 'u32[144,128]{1,0:T(1,128)}', space=vmem, size = 0x12000, scoped, tag = 'internal scratch']
  #allocation2 [shape = 'f32[128,16]{1,0:T(8,128)}', space=vmem, size = 0x10000, scoped, tag = 'scratch operand']
  %s0 = inlined_call_operand.hbm [shape: f32[2,4,16,16], index: 0, kind: input, shape index: {}]
  %s1 = inlined_call_operand.vmem [shape: f32[32], index: 1, kind: input, shape index: {}]
  %s2 = inlined_call_operand.vmem [shape: f32[8], index: 2, kind: input, shape index: {}]
  %s3 = inlined_call_operand.vmem [shape: f32[32,16], index: 3, kind: input, shape index: {}]
  %s4 = inlined_call_operand.vmem [shape: f32[16,32], index: 4, kind: input, shape index: {}]
  %s5 = inlined_call_operand.hbm [shape: f32[2,8,32,32], index: 5, kind: output, shape index: {}]
  %s6 = sld [smem:[#allocation0]]
  $region65: #{tpu_custom_call.1} parent=0
    _
  %s8 = ssub.s32 1, %s6
  %s9 = scalar_select 0, %s8, %s6
  $region1: #{tpu_custom_call.1} parent=0
    #allocation3 [shape = 'u8[65536]{0}', space=vmem, size = 0x10000, scoped, tag = 'input window, operand 0']
    #allocation4 [shape = 's32[2]{0}', space=sflag, size = 0x8, scoped, tag = 'scoped memory for tpu_custom_call.1']
    #allocation5 [shape = 's32[2]{0}', space=sflag, size = 0x8, scoped, tag = 'scoped memory for tpu_custom_call.1']
    #allocation6 [shape = 's32[2]{0}', space=sflag, size = 0x8, scoped, tag = 'scoped memory for tpu_custom_call.1']
    #allocation7 [shape = 'u8[512]{0}', space=smem, size = 0x200, scoped, tag = 'input window, operand 1, single buffered']
    #allocation8 [shape = 'u8[512]{0}', space=smem, size = 0x200, scoped, tag = 'input window, operand 2, single buffered']
    #allocation9 [shape = 's32[1]{0}', space=sflag, size = 0x4, scoped, tag = 'scoped memory for tpu_custom_call.1']
    #allocation10 [shape = 'u8[262144]{0}', space=vmem, size = 0x40000, scoped, tag = 'output window, operand 0']
    %10 = vsyncpa [#allocation4], 0
    %s11 = scalar_lea.sflag [#allocation4], 1
    %12 = vsyncpa %s11, 0
    %13 = vsyncpa [#allocation6], 0
    %14 = vsyncpa [#allocation9], 0
    %15 = vsyncpa [#allocation5], 0
    %s16 = scalar_lea.sflag [#allocation5], 1
    %17 = vsyncpa %s16, 0
    loop: start=0, step=1, limit=4
    $region2: #{tpu_custom_call.1} parent=1 // loop_pre_header
      _
    $region3: #{tpu_custom_call.1} parent=1 // loop_header
      %s19 = sphi 0, %s23
      %p20 = scmp.ge.s32.totalorder %s19, 4
      %s26 = sphi 0, %s38
      %s27 = sphi 0, %s34
      %s28 = sphi 0, %s26
      %s29 = sphi 0, %s27
      %s30 = sphi 0, %s28
      %s31 = sphi 0, %s29
      %s41 = sphi 0, %s43
      %s44 = sphi 0, %s41
      %s45 = sphi 0, %s44
      %s61 = sphi 0, %s45
      %s65 = sphi 0, %s65
      %s67 = sphi 0, %s65
      %s68 = sphi 0, %s67
      %s82 = sphi 0, %s68
      %s86 = sphi 0, %s86
      %s88 = sphi 0, %s86
      %s89 = sphi 0, %s88
      %s103 = sphi 0, %s89
      %s107 = sphi 0, %s107
      %s109 = sphi 0, %s107
      %s110 = sphi 0, %s109
      %s124 = sphi 0, %s110
      %s128 = sphi 0, %s128
      %s130 = sphi 0, %s128
      %s131 = sphi 0, %s130
      %s145 = sphi 0, %s131
      %s153 = sphi 0, %s155
      %s156 = sphi 0, %s153
      %s157 = sphi 0, %s156
      %s173 = sphi 0, %s157
    $region4: #{tpu_custom_call.1} parent=1 // loop_header_branch
      %22 = sbr.rel (%p20) target = $region8
    $region5: #{tpu_custom_call.1} parent=1 // loop_body
      %s24 = ssub.s32 %s19, 1
      %s25 = ssub.s32 %s19, 2
      %s32 = sadd.s32 1, %s27
      %p33 = scmp.ge.s32.totalorder %s32, 1
      %s34 = scalar_select %p33, 0, %s32
      %s35 = sadd.s32 1, %s26
      %s36 = scalar_select %p33, %s35, %s26
      %p37 = scmp.ge.s32.totalorder %s36, 2
      %s38 = scalar_select %p37, 0, %s36
      %s39 = ssub.s32 %s26, %s38
      %p40 = scmp.eq.s32.totalorder %s39, 0
      %s42 = sadd.s32 %s41, 1
      %s43 = scalar_select %p40, %s41, %s42
      %p46 = pneg %p40
      %p47 = scmp.eq.s32.totalorder %s19, 1
      %p48 = por %p46, %p47
      %p49 = scmp.ne.s32.totalorder %s41, %s44
      %p50 = scmp.eq.s32.totalorder %s19, 0
      %p51 = por %p49, %p50
      %p52 = scmp.ne.s32.totalorder %s41, %s44
      %p53 = scmp.eq.s32.totalorder %s24, 1
      %p54 = por %p52, %p53
      %p55 = scmp.ne.s32.totalorder %s44, %s45
      %p56 = scmp.eq.s32.totalorder %s24, 0
      %p57 = por %p55, %p56
      %p58 = scmp.ne.s32.totalorder %s44, %s45
      %p59 = scmp.eq.s32.totalorder %s25, 1
      %p60 = por %p58, %p59
      %p62 = scmp.ne.s32.totalorder %s45, %s61
      %p63 = scmp.eq.s32.totalorder %s25, 0
      %p64 = por %p62, %p63
      %s66 = sadd.s32 %s65, 1
      %p69 = scmp.eq.s32.totalorder %s19, 1
      %p70 = scmp.ne.s32.totalorder %s65, %s67
      %p71 = scmp.eq.s32.totalorder %s19, 0
      %p72 = por %p70, %p71
      %p73 = scmp.ne.s32.totalorder %s65, %s67
      %p74 = scmp.eq.s32.totalorder %s24, 1
      %p75 = por %p73, %p74
      %p76 = scmp.ne.s32.totalorder %s67, %s68
      %p77 = scmp.eq.s32.totalorder %s24, 0
      %p78 = por %p76, %p77
      %p79 = scmp.ne.s32.totalorder %s67, %s68
      %p80 = scmp.eq.s32.totalorder %s25, 1
      %p81 = por %p79, %p80
      %p83 = scmp.ne.s32.totalorder %s68, %s82
      %p84 = scmp.eq.s32.totalorder %s25, 0
      %p85 = por %p83, %p84
      %s87 = sadd.s32 %s86, 1
      %p90 = scmp.eq.s32.totalorder %s19, 1
      %p91 = scmp.ne.s32.totalorder %s86, %s88
      %p92 = scmp.eq.s32.totalorder %s19, 0
      %p93 = por %p91, %p92
      %p94 = scmp.ne.s32.totalorder %s86, %s88
      %p95 = scmp.eq.s32.totalorder %s24, 1
      %p96 = por %p94, %p95
      %p97 = scmp.ne.s32.totalorder %s88, %s89
      %p98 = scmp.eq.s32.totalorder %s24, 0
      %p99 = por %p97, %p98
      %p100 = scmp.ne.s32.totalorder %s88, %s89
      %p101 = scmp.eq.s32.totalorder %s25, 1
      %p102 = por %p100, %p101
      %p104 = scmp.ne.s32.totalorder %s89, %s103
      %p105 = scmp.eq.s32.totalorder %s25, 0
      %p106 = por %p104, %p105
      %s108 = sadd.s32 %s107, 1
      %p111 = scmp.eq.s32.totalorder %s19, 1
      %p112 = scmp.ne.s32.totalorder %s107, %s109
      %p113 = scmp.eq.s32.totalorder %s19, 0
      %p114 = por %p112, %p113
      %p115 = scmp.ne.s32.totalorder %s107, %s109
      %p116 = scmp.eq.s32.totalorder %s24, 1
      %p117 = por %p115, %p116
      %p118 = scmp.ne.s32.totalorder %s109, %s110
      %p119 = scmp.eq.s32.totalorder %s24, 0
      %p120 = por %p118, %p119
      %p121 = scmp.ne.s32.totalorder %s109, %s110
      %p122 = scmp.eq.s32.totalorder %s25, 1
      %p123 = por %p121, %p122
      %p125 = scmp.ne.s32.totalorder %s110, %s124
      %p126 = scmp.eq.s32.totalorder %s25, 0
      %p127 = por %p125, %p126
      %s129 = sadd.s32 %s128, 1
      %p132 = scmp.eq.s32.totalorder %s19, 1
      %p133 = scmp.ne.s32.totalorder %s128, %s130
      %p134 = scmp.eq.s32.totalorder %s19, 0
      %p135 = por %p133, %p134
      %p136 = scmp.ne.s32.totalorder %s128, %s130
      %p137 = scmp.eq.s32.totalorder %s24, 1
      %p138 = por %p136, %p137
      %p139 = scmp.ne.s32.totalorder %s130, %s131
      %p140 = scmp.eq.s32.totalorder %s24, 0
      %p141 = por %p139, %p140
      %p142 = scmp.ne.s32.totalorder %s130, %s131
      %p143 = scmp.eq.s32.totalorder %s25, 1
      %p144 = por %p142, %p143
      %p146 = scmp.ne.s32.totalorder %s131, %s145
      %p147 = scmp.eq.s32.totalorder %s25, 0
      %p148 = por %p146, %p147
      %s149 = ssub.s32 %s26, %s38
      %s150 = ssub.s32 %s27, %s34
      %s151 = sor.u32 %s149, %s150
      %p152 = scmp.eq.s32.totalorder %s151, 0
      %s154 = sadd.s32 %s153, 1
      %s155 = scalar_select %p152, %s153, %s154
      %p158 = pneg %p152
      %p159 = scmp.eq.s32.totalorder %s19, 1
      %p160 = por %p158, %p159
      %p161 = scmp.ne.s32.totalorder %s153, %s156
      %p162 = scmp.eq.s32.totalorder %s19, 0
      %p163 = por %p161, %p162
      %p164 = scmp.ne.s32.totalorder %s153, %s156
      %p165 = scmp.eq.s32.totalorder %s24, 1
      %p166 = por %p164, %p165
      %p167 = scmp.ne.s32.totalorder %s156, %s157
      %p168 = scmp.eq.s32.totalorder %s24, 0
      %p169 = por %p167, %p168
      %p170 = scmp.ne.s32.totalorder %s156, %s157
      %p171 = scmp.eq.s32.totalorder %s25, 1
      %p172 = por %p170, %p171
      %p174 = scmp.ne.s32.totalorder %s157, %s173
      %p175 = scmp.eq.s32.totalorder %s25, 0
      %p176 = por %p174, %p175
      %p177 = scmp.le.s32.totalorder 1, %s19
      %p178 = scmp.lt.s32.totalorder %s19, 3
      %p179 = pnand %p177, %p178
      %p180 = pneg %p179
      // Predicated region
      $region9: #{tpu_custom_call.1} parent=5 // pred_check
        _
      $region10: #{tpu_custom_call.1} parent=5 // pred_check_branch
        %182 = sbr.rel (%p179) target = $region12
      $region11: #{tpu_custom_call.1} parent=5 // pred_region
        %s183 = ssub.s32 %s19, 1
        // Predicated region
        $region13: #{tpu_custom_call.1} parent=11 // pred_check
          %p184 = pneg %p78
        $region14: #{tpu_custom_call.1} parent=11 // pred_check_branch
          %186 = sbr.rel (%p184) target = $region16
        $region15: #{tpu_custom_call.1} parent=11 // pred_region
          %s188 = ssub.s32 16, 16
          %189 = vsyncadd [#allocation6], %s188
          %s191 = sshll.u32 %s1, 4
          %s192 = int_to_ptr.vmem [resolvable:$true] %s191
          %194 = dma.vmem_to_smem %s192, 16, [#allocation7], [#allocation6]
        $region16: #{tpu_custom_call.1} parent=11 // pred_fallthru
          _
        // Predicated region
        $region17: #{tpu_custom_call.1} parent=11 // pred_check
          %p195 = pneg %p99
        $region18: #{tpu_custom_call.1} parent=11 // pred_check_branch
          %197 = sbr.rel (%p195) target = $region20
        $region19: #{tpu_custom_call.1} parent=11 // pred_region
          %s199 = ssub.s32 16, 16
          %200 = vsyncadd [#allocation9], %s199
          %s202 = sshll.u32 %s2, 4
          %s203 = int_to_ptr.vmem [resolvable:$true] %s202
          %205 = dma.vmem_to_smem %s203, 16, [#allocation8], [#allocation9]
        $region20: #{tpu_custom_call.1} parent=11 // pred_fallthru
          _
        // Predicated region
        $region21: #{tpu_custom_call.1} parent=11 // pred_check
          %p206 = pneg %p120
        $region22: #{tpu_custom_call.1} parent=11 // pred_check_branch
          %208 = sbr.rel (%p206) target = $region24
        $region23: #{tpu_custom_call.1} parent=11 // pred_region
          _
        $region24: #{tpu_custom_call.1} parent=11 // pred_fallthru
          _
        // Predicated region
        $region25: #{tpu_custom_call.1} parent=11 // pred_check
          %p209 = pneg %p141
        $region26: #{tpu_custom_call.1} parent=11 // pred_check_branch
          %211 = sbr.rel (%p209) target = $region28
        $region27: #{tpu_custom_call.1} parent=11 // pred_region
          _
        $region28: #{tpu_custom_call.1} parent=11 // pred_fallthru
          _
      $region12: #{tpu_custom_call.1} parent=5 // pred_fallthru
        _
      %p212 = scmp.lt.s32.totalorder %s19, 2
      // Predicated region
      $region29: #{tpu_custom_call.1} parent=5 // pred_check
        %p213 = pneg %p212
      $region30: #{tpu_custom_call.1} parent=5 // pred_check_branch
        %215 = sbr.rel (%p213) target = $region32
      $region31: #{tpu_custom_call.1} parent=5 // pred_region
        // Predicated region
        $region33: #{tpu_custom_call.1} parent=31 // pred_check
          %p216 = pneg %p51
        $region34: #{tpu_custom_call.1} parent=31 // pred_check_branch
          %218 = sbr.rel (%p216) target = $region36
        $region35: #{tpu_custom_call.1} parent=31 // pred_region
          %s219 = sand.u32 %s41, 1
          %s220 = scalar_lea.sflag [#allocation4], %s219
          %s221 = sand.u32 %s41, 1
          %s222 = smul.addr %s221, 64
          %s223 = scalar_lea.vmem [#allocation3], %s222
          %s225 = ssub.s32 1024, 1024
          %226 = vsyncadd %s220, %s225
          %s227 = smul.addr %s26, 8
          %s228 = smul.addr %s227, 128
          %s229 = scalar_lea.hbm %s0, %s228
          %s230 = sshll.u32 %s223, 4
          %s231 = int_to_ptr.vmem [resolvable:$true] %s230
          %236 = dma.hbm_to_vmem [thread:$0]  %s229, 1024, %s231, %s220, 128, 128, 8
        $region36: #{tpu_custom_call.1} parent=31 // pred_fallthru
          _
      $region32: #{tpu_custom_call.1} parent=5 // pred_fallthru
        _
      %p237 = scmp.le.s32.totalorder 1, %s19
      %p238 = scmp.lt.s32.totalorder %s19, 3
      %p239 = pnand %p237, %p238
      %p240 = pneg %p239
      // Predicated region
      $region37: #{tpu_custom_call.1} parent=5 // pred_check
        _
      $region38: #{tpu_custom_call.1} parent=5 // pred_check_branch
        %242 = sbr.rel (%p239) target = $region40
      $region39: #{tpu_custom_call.1} parent=5 // pred_region
        %s243 = ssub.s32 %s19, 1
        %s244 = sand.u32 %s44, 1
        %s245 = scalar_lea.sflag [#allocation4], %s244
        %s246 = sand.u32 %s44, 1
        %s247 = smul.addr %s246, 64
        %s248 = scalar_lea.vmem [#allocation3], %s247
        // Predicated region
        $region41: #{tpu_custom_call.1} parent=39 // pred_check
          %p249 = pneg %p57
        $region42: #{tpu_custom_call.1} parent=39 // pred_check_branch
          %251 = sbr.rel (%p249) target = $region44
        $region43: #{tpu_custom_call.1} parent=39 // pred_region
          %252 = dma.done %s245, 1024
        $region44: #{tpu_custom_call.1} parent=39 // pred_fallthru
          _
        // Predicated region
        $region45: #{tpu_custom_call.1} parent=39 // pred_check
          %p253 = pneg %p78
        $region46: #{tpu_custom_call.1} parent=39 // pred_check_branch
          %255 = sbr.rel (%p253) target = $region48
        $region47: #{tpu_custom_call.1} parent=39 // pred_region
          %256 = dma.done [#allocation6], 16
        $region48: #{tpu_custom_call.1} parent=39 // pred_fallthru
          _
        // Predicated region
        $region49: #{tpu_custom_call.1} parent=39 // pred_check
          %p257 = pneg %p99
        $region50: #{tpu_custom_call.1} parent=39 // pred_check_branch
          %259 = sbr.rel (%p257) target = $region52
        $region51: #{tpu_custom_call.1} parent=39 // pred_region
          %260 = dma.done [#allocation9], 16
        $region52: #{tpu_custom_call.1} parent=39 // pred_fallthru
          _
        %261 = sfence
        %s262 = sand.u32 %s44, 1
        %s263 = scalar_lea.sflag [#allocation4], %s262
        %s264 = sand.u32 %s44, 1
        %s265 = smul.addr %s264, 64
        %s266 = scalar_lea.vmem [#allocation3], %s265
        %p267 = pneg %p57
        %p268 = pneg %p54
        %p269 = pneg %p78
        %p270 = pneg %p75
        %p271 = pneg %p99
        %p272 = pneg %p96
        %p273 = pneg %p120
        %p274 = pneg %p117
        %p275 = pneg %p141
        %p276 = pneg %p138
        %p277 = pneg %p169
        %p278 = pneg %p166
        %s279 = sand.u32 %s156, 1
        %s280 = scalar_lea.sflag [#allocation5], %s279
        %s281 = sand.u32 %s156, 1
        %s282 = smul.addr %s281, 256
        %s283 = scalar_lea.vmem [#allocation10], %s282
        %s284 = smul.u32 8, %s29
        %s285 = smul.u32 %s29, 8
        %v286 = vld [vmem:[%s3] sm:$0xff]
        %v287 = vld [vmem:[%s3 + $0x8] sm:$0xff]
        %v288 = vld [vmem:[%s3 + $0x10] sm:$0xff]
        %v289 = vld [vmem:[%s3 + $0x18] sm:$0xff]
        %v290 = vld [vmem:[%s4] sm:$0xff]
        %v291 = vld [vmem:[%s4 + $0x8] sm:$0xff]
        %v292 = vld [vmem:[%s248] sm:$0xff]
        %v293 = vld [vmem:[%s248 + $0x8] sm:$0xff]
        %s294 = scalar_lea.vmem %s248, 16 [#allocation3]
        %v295 = vld [vmem:[%s294] sm:$0xff]
        %v296 = vld [vmem:[%s294 + $0x8] sm:$0xff]
        %s297 = scalar_lea.vmem %s248, 32 [#allocation3]
        %v298 = vld [vmem:[%s297] sm:$0xff]
        %v299 = vld [vmem:[%s297 + $0x8] sm:$0xff]
        %s300 = scalar_lea.vmem %s248, 48 [#allocation3]
        %v301 = vld [vmem:[%s300] sm:$0xff]
        %v302 = vld [vmem:[%s300 + $0x8] sm:$0xff]
        %s303 = smul.u32 %s29, 32
        %s304 = sld [smem:[#allocation7 + %s303]]
        %v305 = vstv %s304
        %v306 = vmul.f32 %v292, %v305
        %v307 = vmul.f32 %v293, %v305
        %s308 = sadd.s32 %s303, 1
        %s309 = sld [smem:[#allocation7 + %s308]]
        %v310 = vstv %s309
        %v311 = vmul.f32 %v295, %v310
        %v312 = vmul.f32 %v296, %v310
        %v313 = vadd.f32 %v306, %v311
        %v314 = vadd.f32 %v307, %v312
        %s315 = sadd.s32 %s303, 2
        %s316 = sld [smem:[#allocation7 + %s315]]
        %v317 = vstv %s316
        %v318 = vmul.f32 %v298, %v317
        %v319 = vmul.f32 %v299, %v317
        %v320 = vadd.f32 %v313, %v318
        %v321 = vadd.f32 %v314, %v319
        %s322 = sadd.s32 %s303, 3
        %s323 = sld [smem:[#allocation7 + %s322]]
        %v324 = vstv %s323
        %v325 = vmul.f32 %v301, %v324
        %v326 = vmul.f32 %v302, %v324
        %v327 = vadd.f32 %v320, %v325
        %v328 = vadd.f32 %v321, %v326
        %s329 = sld [smem:[#allocation8 + %s285]]
        %v330 = vstv %s329
        %v331 = vadd.f32 %v327, %v330
        %v332 = vadd.f32 %v328, %v330
        %v333 = vmax.f32 %v331, 0.0
        %v334 = vmax.f32 %v332, 0.0
        %vm335 = vcmask 130048
        %336 = vst.msk [vmem:[#allocation2] sm:$0xff] %vm335, %v333
        %337 = vst.msk [vmem:[#allocation2 + $0x8] sm:$0xff] %vm335, %v334
        %s338 = sadd.s32 %s285, 1
        %s339 = smul.u32 %s338, 4
        %s340 = sld [smem:[#allocation7 + %s339]]
        %v341 = vstv %s340
        %v342 = vmul.f32 %v292, %v341
        %v343 = vmul.f32 %v293, %v341
        %s344 = sadd.s32 %s339, 1
        %s345 = sld [smem:[#allocation7 + %s344]]
        %v346 = vstv %s345
        %v347 = vmul.f32 %v295, %v346
        %v348 = vmul.f32 %v296, %v346
        %v349 = vadd.f32 %v342, %v347
        %v350 = vadd.f32 %v343, %v348
        %s351 = sadd.s32 %s339, 2
        %s352 = sld [smem:[#allocation7 + %s351]]
        %v353 = vstv %s352
        %v354 = vmul.f32 %v298, %v353
        %v355 = vmul.f32 %v299, %v353
        %v356 = vadd.f32 %v349, %v354
        %v357 = vadd.f32 %v350, %v355
        %s358 = sadd.s32 %s339, 3
        %s359 = sld [smem:[#allocation7 + %s358]]
        %v360 = vstv %s359
        %v361 = vmul.f32 %v301, %v360
        %v362 = vmul.f32 %v302, %v360
        %v363 = vadd.f32 %v356, %v361
        %v364 = vadd.f32 %v357, %v362
        %s365 = sld [smem:[#allocation8 + %s338]]
        %v366 = vstv %s365
        %v367 = vadd.f32 %v363, %v366
        %v368 = vadd.f32 %v364, %v366
        %v369 = vmax.f32 %v367, 0.0
        %v370 = vmax.f32 %v368, 0.0
        %371 = vst.msk [vmem:[#allocation2 + $0x10] sm:$0xff] %vm335, %v369
        %372 = vst.msk [vmem:[#allocation2 + $0x18] sm:$0xff] %vm335, %v370
        %s373 = sadd.s32 %s285, 2
        %s374 = smul.u32 %s373, 4
        %s375 = sld [smem:[#allocation7 + %s374]]
        %v376 = vstv %s375
        %v377 = vmul.f32 %v292, %v376
        %v378 = vmul.f32 %v293, %v376
        %s379 = sadd.s32 %s374, 1
        %s380 = sld [smem:[#allocation7 + %s379]]
        %v381 = vstv %s380
        %v382 = vmul.f32 %v295, %v381
        %v383 = vmul.f32 %v296, %v381
        %v384 = vadd.f32 %v377, %v382
        %v385 = vadd.f32 %v378, %v383
        %s386 = sadd.s32 %s374, 2
        %s387 = sld [smem:[#allocation7 + %s386]]
        %v388 = vstv %s387
        %v389 = vmul.f32 %v298, %v388
        %v390 = vmul.f32 %v299, %v388
        %v391 = vadd.f32 %v384, %v389
        %v392 = vadd.f32 %v385, %v390
        %s393 = sadd.s32 %s374, 3
        %s394 = sld [smem:[#allocation7 + %s393]]
        %v395 = vstv %s394
        %v396 = vmul.f32 %v301, %v395
        %v397 = vmul.f32 %v302, %v395
        %v398 = vadd.f32 %v391, %v396
        %v399 = vadd.f32 %v392, %v397
        %s400 = sld [smem:[#allocation8 + %s373]]
        %v401 = vstv %s400
        %v402 = vadd.f32 %v398, %v401
        %v403 = vadd.f32 %v399, %v401
        %v404 = vmax.f32 %v402, 0.0
        %v405 = vmax.f32 %v403, 0.0
        %406 = vst.msk [vmem:[#allocation2 + $0x20] sm:$0xff] %vm335, %v404
        %407 = vst.msk [vmem:[#allocation2 + $0x28] sm:$0xff] %vm335, %v405
        %s408 = sadd.s32 %s285, 3
        %s409 = smul.u32 %s408, 4
        %s410 = sld [smem:[#allocation7 + %s409]]
        %v411 = vstv %s410
        %v412 = vmul.f32 %v292, %v411
        %v413 = vmul.f32 %v293, %v411
        %s414 = sadd.s32 %s409, 1
        %s415 = sld [smem:[#allocation7 + %s414]]
        %v416 = vstv %s415
        %v417 = vmul.f32 %v295, %v416
        %v418 = vmul.f32 %v296, %v416
        %v419 = vadd.f32 %v412, %v417
        %v420 = vadd.f32 %v413, %v418
        %s421 = sadd.s32 %s409, 2
        %s422 = sld [smem:[#allocation7 + %s421]]
        %v423 = vstv %s422
        %v424 = vmul.f32 %v298, %v423
        %v425 = vmul.f32 %v299, %v423
        %v426 = vadd.f32 %v419, %v424
        %v427 = vadd.f32 %v420, %v425
        %s428 = sadd.s32 %s409, 3
        %s429 = sld [smem:[#allocation7 + %s428]]
        %v430 = vstv %s429
        %v431 = vmul.f32 %v301, %v430
        %v432 = vmul.f32 %v302, %v430
        %v433 = vadd.f32 %v426, %v431
        %v434 = vadd.f32 %v427, %v432
        %s435 = sld [smem:[#allocation8 + %s408]]
        %v436 = vstv %s435
        %v437 = vadd.f32 %v433, %v436
        %v438 = vadd.f32 %v434, %v436
        %v439 = vmax.f32 %v437, 0.0
        %v440 = vmax.f32 %v438, 0.0
        %441 = vst.msk [vmem:[#allocation2 + $0x30] sm:$0xff] %vm335, %v439
        %442 = vst.msk [vmem:[#allocation2 + $0x38] sm:$0xff] %vm335, %v440
        %s443 = sadd.s32 %s285, 4
        %s444 = smul.u32 %s443, 4
        %s445 = sld [smem:[#allocation7 + %s444]]
        %v446 = vstv %s445
        %v447 = vmul.f32 %v292, %v446
        %v448 = vmul.f32 %v293, %v446
        %s449 = sadd.s32 %s444, 1
        %s450 = sld [smem:[#allocation7 + %s449]]
        %v451 = vstv %s450
        %v452 = vmul.f32 %v295, %v451
        %v453 = vmul.f32 %v296, %v451
        %v454 = vadd.f32 %v447, %v452
        %v455 = vadd.f32 %v448, %v453
        %s456 = sadd.s32 %s444, 2
        %s457 = sld [smem:[#allocation7 + %s456]]
        %v458 = vstv %s457
        %v459 = vmul.f32 %v298, %v458
        %v460 = vmul.f32 %v299, %v458
        %v461 = vadd.f32 %v454, %v459
        %v462 = vadd.f32 %v455, %v460
        %s463 = sadd.s32 %s444, 3
        %s464 = sld [smem:[#allocation7 + %s463]]
        %v465 = vstv %s464
        %v466 = vmul.f32 %v301, %v465
        %v467 = vmul.f32 %v302, %v465
        %v468 = vadd.f32 %v461, %v466
        %v469 = vadd.f32 %v462, %v467
        %s470 = sld [smem:[#allocation8 + %s443]]
        %v471 = vstv %s470
        %v472 = vadd.f32 %v468, %v471
        %v473 = vadd.f32 %v469, %v471
        %v474 = vmax.f32 %v472, 0.0
        %v475 = vmax.f32 %v473, 0.0
        %476 = vst.msk [vmem:[#allocation2 + $0x40] sm:$0xff] %vm335, %v474
        %477 = vst.msk [vmem:[#allocation2 + $0x48] sm:$0xff] %vm335, %v475
        %s478 = sadd.s32 %s285, 5
        %s479 = smul.u32 %s478, 4
        %s480 = sld [smem:[#allocation7 + %s479]]
        %v481 = vstv %s480
        %v482 = vmul.f32 %v292, %v481
        %v483 = vmul.f32 %v293, %v481
        %s484 = sadd.s32 %s479, 1
        %s485 = sld [smem:[#allocation7 + %s484]]
        %v486 = vstv %s485
        %v487 = vmul.f32 %v295, %v486
        %v488 = vmul.f32 %v296, %v486
        %v489 = vadd.f32 %v482, %v487
        %v490 = vadd.f32 %v483, %v488
        %s491 = sadd.s32 %s479, 2
        %s492 = sld [smem:[#allocation7 + %s491]]
        %v493 = vstv %s492
        %v494 = vmul.f32 %v298, %v493
        %v495 = vmul.f32 %v299, %v493
        %v496 = vadd.f32 %v489, %v494
        %v497 = vadd.f32 %v490, %v495
        %s498 = sadd.s32 %s479, 3
        %s499 = sld [smem:[#allocation7 + %s498]]
        %v500 = vstv %s499
        %v501 = vmul.f32 %v301, %v500
        %v502 = vmul.f32 %v302, %v500
        %v503 = vadd.f32 %v496, %v501
        %v504 = vadd.f32 %v497, %v502
        %s505 = sld [smem:[#allocation8 + %s478]]
        %v506 = vstv %s505
        %v507 = vadd.f32 %v503, %v506
        %v508 = vadd.f32 %v504, %v506
        %v509 = vmax.f32 %v507, 0.0
        %v510 = vmax.f32 %v508, 0.0
        %511 = vst.msk [vmem:[#allocation2 + $0x50] sm:$0xff] %vm335, %v509
        %512 = vst.msk [vmem:[#allocation2 + $0x58] sm:$0xff] %vm335, %v510
        %s513 = sadd.s32 %s285, 6
        %s514 = smul.u32 %s513, 4
        %s515 = sld [smem:[#allocation7 + %s514]]
        %v516 = vstv %s515
        %v517 = vmul.f32 %v292, %v516
        %v518 = vmul.f32 %v293, %v516
        %s519 = sadd.s32 %s514, 1
        %s520 = sld [smem:[#allocation7 + %s519]]
        %v521 = vstv %s520
        %v522 = vmul.f32 %v295, %v521
        %v523 = vmul.f32 %v296, %v521
        %v524 = vadd.f32 %v517, %v522
        %v525 = vadd.f32 %v518, %v523
        %s526 = sadd.s32 %s514, 2
        %s527 = sld [smem:[#allocation7 + %s526]]
        %v528 = vstv %s527
        %v529 = vmul.f32 %v298, %v528
        %v530 = vmul.f32 %v299, %v528
        %v531 = vadd.f32 %v524, %v529
        %v532 = vadd.f32 %v525, %v530
        %s533 = sadd.s32 %s514, 3
        %s534 = sld [smem:[#allocation7 + %s533]]
        %v535 = vstv %s534
        %v536 = vmul.f32 %v301, %v535
        %v537 = vmul.f32 %v302, %v535
        %v538 = vadd.f32 %v531, %v536
        %v539 = vadd.f32 %v532, %v537
        %s540 = sld [smem:[#allocation8 + %s513]]
        %v541 = vstv %s540
        %v542 = vadd.f32 %v538, %v541
        %v543 = vadd.f32 %v539, %v541
        %v544 = vmax.f32 %v542, 0.0
        %v545 = vmax.f32 %v543, 0.0
        %546 = vst.msk [vmem:[#allocation2 + $0x60] sm:$0xff] %vm335, %v544
        %547 = vst.msk [vmem:[#allocation2 + $0x68] sm:$0xff] %vm335, %v545
        %s548 = sadd.s32 %s285, 7
        %s549 = smul.u32 %s548, 4
        %s550 = sld [smem:[#allocation7 + %s549]]
        %v551 = vstv %s550
        %v552 = vmul.f32 %v292, %v551
        %v553 = vmul.f32 %v293, %v551
        %s554 = sadd.s32 %s549, 1
        %s555 = sld [smem:[#allocation7 + %s554]]
        %v556 = vstv %s555
        %v557 = vmul.f32 %v295, %v556
        %v558 = vmul.f32 %v296, %v556
        %v559 = vadd.f32 %v552, %v557
        %v560 = vadd.f32 %v553, %v558
        %s561 = sadd.s32 %s549, 2
        %s562 = sld [smem:[#allocation7 + %s561]]
        %v563 = vstv %s562
        %v564 = vmul.f32 %v298, %v563
        %v565 = vmul.f32 %v299, %v563
        %v566 = vadd.f32 %v559, %v564
        %v567 = vadd.f32 %v560, %v565
        %s568 = sadd.s32 %s549, 3
        %s569 = sld [smem:[#allocation7 + %s568]]
        %v570 = vstv %s569
        %v571 = vmul.f32 %v301, %v570
        %v572 = vmul.f32 %v302, %v570
        %v573 = vadd.f32 %v566, %v571
        %v574 = vadd.f32 %v567, %v572
        %s575 = sld [smem:[#allocation8 + %s548]]
        %v576 = vstv %s575
        %v577 = vadd.f32 %v573, %v576
        %v578 = vadd.f32 %v574, %v576
        %v579 = vmax.f32 %v577, 0.0
        %v580 = vmax.f32 %v578, 0.0
        %581 = vst.msk [vmem:[#allocation2 + $0x70] sm:$0xff] %vm335, %v579
        %582 = vst.msk [vmem:[#allocation2 + $0x78] sm:$0xff] %vm335, %v580
        %v583 = vld [vmem:[#allocation2] sm:$0xff]
        %v584 = vld [vmem:[#allocation2 + $0x8] sm:$0xff]
        %v585 = vld [vmem:[#allocation2 + $0x10] sm:$0xff]
        %v586 = vld [vmem:[#allocation2 + $0x18] sm:$0xff]
        %v587 = vld [vmem:[#allocation2 + $0x20] sm:$0xff]
        %v588 = vld [vmem:[#allocation2 + $0x28] sm:$0xff]
        %v589 = vld [vmem:[#allocation2 + $0x30] sm:$0xff]
        %v590 = vld [vmem:[#allocation2 + $0x38] sm:$0xff]
        %v591 = vld [vmem:[#allocation2 + $0x40] sm:$0xff]
        %v592 = vld [vmem:[#allocation2 + $0x48] sm:$0xff]
        %v593 = vld [vmem:[#allocation2 + $0x50] sm:$0xff]
        %v594 = vld [vmem:[#allocation2 + $0x58] sm:$0xff]
        %v595 = vld [vmem:[#allocation2 + $0x60] sm:$0xff]
        %v596 = vld [vmem:[#allocation2 + $0x68] sm:$0xff]
        %v597 = vld [vmem:[#allocation2 + $0x70] sm:$0xff]
        %v598 = vld [vmem:[#allocation2 + $0x78] sm:$0xff]
        %v600 = vsel %vm335, %v583, 0
        %v603 = vsel %vm335, %v584, 0
        %v606 = vsel %vm335, %v585, 0
        %v609 = vsel %vm335, %v586, 0
        %v612 = vsel %vm335, %v587, 0
        %v615 = vsel %vm335, %v588, 0
        %v618 = vsel %vm335, %v589, 0
        %v621 = vsel %vm335, %v590, 0
        %v624 = vsel %vm335, %v591, 0
        %v627 = vsel %vm335, %v592, 0
        %v630 = vsel %vm335, %v593, 0
        %v633 = vsel %vm335, %v594, 0
        %v636 = vsel %vm335, %v595, 0
        %v639 = vsel %vm335, %v596, 0
        %v642 = vsel %vm335, %v597, 0
        %v645 = vsel %vm335, %v598, 0
        %647 = vmatprep.subr.mxu0 0.0
        %648 = vmatpush1.msra.mxu0 %v290
        %649 = vmatprep.subr.mxu0 0.0
        %650 = vmatpush1.msra.mxu0 %v291
        %651 = vmatprep.subr.mxu0 0.0
        %652 = vmatpush1.msra.mxu0 0.0
        %653 = vmatprep.subr.mxu0 0.0
        %654 = vmatpush1.msra.mxu0 0.0
        %655 = vmatprep.subr.mxu0 0.0
        %656 = vmatpush1.msra.mxu0 0.0
        %657 = vmatprep.subr.mxu0 0.0
        %658 = vmatpush1.msra.mxu0 0.0
        %659 = vmatprep.subr.mxu0 0.0
        %660 = vmatpush1.msra.mxu0 0.0
        %661 = vmatprep.subr.mxu0 0.0
        %662 = vmatpush1.msra.mxu0 0.0
        %663 = vmatprep.subr.mxu0 0.0
        %664 = vmatpush1.msra.mxu0 0.0
        %665 = vmatprep.subr.mxu0 0.0
        %666 = vmatpush1.msra.mxu0 0.0
        %667 = vmatprep.subr.mxu0 0.0
        %668 = vmatpush1.msra.mxu0 0.0
        %669 = vmatprep.subr.mxu0 0.0
        %670 = vmatpush1.msra.mxu0 0.0
        %671 = vmatprep.subr.mxu0 0.0
        %672 = vmatpush1.msra.mxu0 0.0
        %673 = vmatprep.subr.mxu0 0.0
        %674 = vmatpush1.msra.mxu0 0.0
        %675 = vmatprep.subr.mxu0 0.0
        %676 = vmatpush1.msra.mxu0 0.0
        %677 = vmatprep.subr.mxu0 0.0
        %678 = vmatpush1.msra.mxu0 0.0
        %679 = vmatprep.subr.mxu0 0.0
        %680 = vmatpush1.msra.mxu0 0.0
        %681 = vmatprep.subr.mxu0 0.0
        %682 = vmatpush1.msra.mxu0 0.0
        %683 = vmatprep.subr.mxu0 0.0
        %684 = vmatpush1.msra.mxu0 0.0
        %685 = vmatprep.subr.mxu0 0.0
        %686 = vmatpush1.msra.mxu0 0.0
        %687 = vmatprep.subr.mxu0 0.0
        %688 = vmatpush1.msra.mxu0 0.0
        %689 = vmatprep.subr.mxu0 0.0
        %690 = vmatpush1.msra.mxu0 0.0
        %691 = vmatprep.subr.mxu0 0.0
        %692 = vmatpush1.msra.mxu0 0.0
        %693 = vmatprep.subr.mxu0 0.0
        %694 = vmatpush1.msra.mxu0 0.0
        %695 = vmatprep.subr.mxu0 0.0
        %696 = vmatpush1.msra.mxu0 0.0
        %697 = vmatprep.subr.mxu0 0.0
        %698 = vmatpush1.msra.mxu0 0.0
        %699 = vmatprep.subr.mxu0 0.0
        %700 = vmatpush1.msra.mxu0 0.0
        %701 = vmatprep.subr.mxu0 0.0
        %702 = vmatpush1.msra.mxu0 0.0
        %703 = vmatprep.subr.mxu0 0.0
        %704 = vmatpush1.msra.mxu0 0.0
        %705 = vmatprep.subr.mxu0 0.0
        %706 = vmatpush1.msra.mxu0 0.0
        %707 = vmatprep.subr.mxu0 0.0
        %708 = vmatpush1.msra.mxu0 0.0
        %709 = vmatprep.subr.mxu0 0.0
        %710 = vmatpush1.msra.mxu0 0.0
        %711 = vmatprep.mubr.f32.mxu0 0.0
        %712 = vmatmul.mubr.f32.gmra.mrb[0].mxu0 %v600
        %v713 = vpop.f32.mrb[0].mxu0
        %v714 = vadd.f32 0.0, %v713
        %v715 = vpop.f32.mrb[0].mxu0
        %716 = vmatprep.mubr.f32.mxu0 0.0
        %717 = vmatmul.mubr.f32.gmra.mrb[0].mxu0 %v603
        %v718 = vpop.f32.mrb[0].mxu0
        %v719 = vadd.f32 0.0, %v718
        %v720 = vpop.f32.mrb[0].mxu0
        %721 = vmatprep.mubr.f32.mxu0 0.0
        %722 = vmatmul.mubr.f32.gmra.mrb[0].mxu0 %v606
        %v723 = vpop.f32.mrb[0].mxu0
        %v724 = vadd.f32 0.0, %v723
        %v725 = vpop.f32.mrb[0].mxu0
        %726 = vmatprep.mubr.f32.mxu0 0.0
        %727 = vmatmul.mubr.f32.gmra.mrb[0].mxu0 %v609
        %v728 = vpop.f32.mrb[0].mxu0
        %v729 = vadd.f32 0.0, %v728
        %v730 = vpop.f32.mrb[0].mxu0
        %731 = vmatprep.mubr.f32.mxu0 0.0
        %732 = vmatmul.mubr.f32.gmra.mrb[0].mxu0 %v612
        %v733 = vpop.f32.mrb[0].mxu0
        %v734 = vadd.f32 0.0, %v733
        %v735 = vpop.f32.mrb[0].mxu0
        %736 = vmatprep.mubr.f32.mxu0 0.0
        %737 = vmatmul.mubr.f32.gmra.mrb[0].mxu0 %v615
        %v738 = vpop.f32.mrb[0].mxu0
        %v739 = vadd.f32 0.0, %v738
        %v740 = vpop.f32.mrb[0].mxu0
        %741 = vmatprep.mubr.f32.mxu0 0.0
        %742 = vmatmul.mubr.f32.gmra.mrb[0].mxu0 %v618
        %v743 = vpop.f32.mrb[0].mxu0
        %v744 = vadd.f32 0.0, %v743
        %v745 = vpop.f32.mrb[0].mxu0
        %746 = vmatprep.mubr.f32.mxu0 0.0
        %747 = vmatmul.mubr.f32.gmra.mrb[0].mxu0 %v621
        %v748 = vpop.f32.mrb[0].mxu0
        %v749 = vadd.f32 0.0, %v748
        %v750 = vpop.f32.mrb[0].mxu0
        %751 = vmatprep.mubr.f32.mxu0 0.0
        %752 = vmatmul.mubr.f32.gmra.mrb[0].mxu0 %v624
        %v753 = vpop.f32.mrb[0].mxu0
        %v754 = vadd.f32 0.0, %v753
        %v755 = vpop.f32.mrb[0].mxu0
        %756 = vmatprep.mubr.f32.mxu0 0.0
        %757 = vmatmul.mubr.f32.gmra.mrb[0].mxu0 %v627
        %v758 = vpop.f32.mrb[0].mxu0
        %v759 = vadd.f32 0.0, %v758
        %v760 = vpop.f32.mrb[0].mxu0
        %761 = vmatprep.mubr.f32.mxu0 0.0
        %762 = vmatmul.mubr.f32.gmra.mrb[0].mxu0 %v630
        %v763 = vpop.f32.mrb[0].mxu0
        %v764 = vadd.f32 0.0, %v763
        %v765 = vpop.f32.mrb[0].mxu0
        %766 = vmatprep.mubr.f32.mxu0 0.0
        %767 = vmatmul.mubr.f32.gmra.mrb[0].mxu0 %v633
        %v768 = vpop.f32.mrb[0].mxu0
        %v769 = vadd.f32 0.0, %v768
        %v770 = vpop.f32.mrb[0].mxu0
        %771 = vmatprep.mubr.f32.mxu0 0.0
        %772 = vmatmul.mubr.f32.gmra.mrb[0].mxu0 %v636
        %v773 = vpop.f32.mrb[0].mxu0
        %v774 = vadd.f32 0.0, %v773
        %v775 = vpop.f32.mrb[0].mxu0
        %776 = vmatprep.mubr.f32.mxu0 0.0
        %777 = vmatmul.mubr.f32.gmra.mrb[0].mxu0 %v639
        %v778 = vpop.f32.mrb[0].mxu0
        %v779 = vadd.f32 0.0, %v778
        %v780 = vpop.f32.mrb[0].mxu0
        %781 = vmatprep.mubr.f32.mxu0 0.0
        %782 = vmatmul.mubr.f32.gmra.mrb[0].mxu0 %v642
        %v783 = vpop.f32.mrb[0].mxu0
        %v784 = vadd.f32 0.0, %v783
        %v785 = vpop.f32.mrb[0].mxu0
        %786 = vmatprep.mubr.f32.mxu0 0.0
        %787 = vmatmul.mubr.f32.gmra.mrb[0].mxu0 %v645
        %v788 = vpop.f32.mrb[0].mxu0
        %v789 = vadd.f32 0.0, %v788
        %v790 = vpop.f32.mrb[0].mxu0
        %791 = vdwg.mxu0
        %v793 = vsel %vm335, %v286, 0
        %v796 = vsel %vm335, %v287, 0
        %v799 = vsel %vm335, %v288, 0
        %v802 = vsel %vm335, %v289, 0
        %804 = vmatprep.subr.mxu0 0.0
        %805 = vmatpush1.msra.mxu0 %v714
        %806 = vmatprep.subr.mxu0 0.0
        %807 = vmatpush1.msra.mxu0 %v719
        %808 = vmatprep.subr.mxu0 0.0
        %809 = vmatpush1.msra.mxu0 0.0
        %810 = vmatprep.subr.mxu0 0.0
        %811 = vmatpush1.msra.mxu0 0.0
        %812 = vmatprep.subr.mxu0 0.0
        %813 = vmatpush1.msra.mxu0 0.0
        %814 = vmatprep.subr.mxu0 0.0
        %815 = vmatpush1.msra.mxu0 0.0
        %816 = vmatprep.subr.mxu0 0.0
        %817 = vmatpush1.msra.mxu0 0.0
        %818 = vmatprep.subr.mxu0 0.0
        %819 = vmatpush1.msra.mxu0 0.0
        %820 = vmatprep.subr.mxu0 0.0
        %821 = vmatpush1.msra.mxu0 0.0
        %822 = vmatprep.subr.mxu0 0.0
        %823 = vmatpush1.msra.mxu0 0.0
        %824 = vmatprep.subr.mxu0 0.0
        %825 = vmatpush1.msra.mxu0 0.0
        %826 = vmatprep.subr.mxu0 0.0
        %827 = vmatpush1.msra.mxu0 0.0
        %828 = vmatprep.subr.mxu0 0.0
        %829 = vmatpush1.msra.mxu0 0.0
        %830 = vmatprep.subr.mxu0 0.0
        %831 = vmatpush1.msra.mxu0 0.0
        %832 = vmatprep.subr.mxu0 0.0
        %833 = vmatpush1.msra.mxu0 0.0
        %834 = vmatprep.subr.mxu0 0.0
        %835 = vmatpush1.msra.mxu0 0.0
        %836 = vmatprep.subr.mxu0 0.0
        %837 = vmatpush1.msra.mxu0 0.0
        %838 = vmatprep.subr.mxu0 0.0
        %839 = vmatpush1.msra.mxu0 0.0
        %840 = vmatprep.subr.mxu0 0.0
        %841 = vmatpush1.msra.mxu0 0.0
        %842 = vmatprep.subr.mxu0 0.0
        %843 = vmatpush1.msra.mxu0 0.0
        %844 = vmatprep.subr.mxu0 0.0
        %845 = vmatpush1.msra.mxu0 0.0
        %846 = vmatprep.subr.mxu0 0.0
        %847 = vmatpush1.msra.mxu0 0.0
        %848 = vmatprep.subr.mxu0 0.0
        %849 = vmatpush1.msra.mxu0 0.0
        %850 = vmatprep.subr.mxu0 0.0
        %851 = vmatpush1.msra.mxu0 0.0
        %852 = vmatprep.subr.mxu0 0.0
        %853 = vmatpush1.msra.mxu0 0.0
        %854 = vmatprep.subr.mxu0 0.0
        %855 = vmatpush1.msra.mxu0 0.0
        %856 = vmatprep.subr.mxu0 0.0
        %857 = vmatpush1.msra.mxu0 0.0
        %858 = vmatprep.subr.mxu0 0.0
        %859 = vmatpush1.msra.mxu0 0.0
        %860 = vmatprep.subr.mxu0 0.0
        %861 = vmatpush1.msra.mxu0 0.0
        %862 = vmatprep.subr.mxu0 0.0
        %863 = vmatpush1.msra.mxu0 0.0
        %864 = vmatprep.subr.mxu0 0.0
        %865 = vmatpush1.msra.mxu0 0.0
        %866 = vmatprep.subr.mxu0 0.0
        %867 = vmatpush1.msra.mxu0 0.0
        %868 = vmatprep.mubr.f32.mxu0 0.0
        %869 = vmatmul.mubr.f32.gmra.mrb[0].mxu0 %v793
        %v870 = vpop.f32.mrb[0].mxu0
        %v871 = vadd.f32 0.0, %v870
        %v872 = vpop.f32.mrb[0].mxu0
        %873 = vmatprep.mubr.f32.mxu0 0.0
        %874 = vmatmul.mubr.f32.gmra.mrb[0].mxu0 %v796
        %v875 = vpop.f32.mrb[0].mxu0
        %v876 = vadd.f32 0.0, %v875
        %v877 = vpop.f32.mrb[0].mxu0
        %878 = vmatprep.mubr.f32.mxu0 0.0
        %879 = vmatmul.mubr.f32.gmra.mrb[0].mxu0 %v799
        %v880 = vpop.f32.mrb[0].mxu0
        %v881 = vadd.f32 0.0, %v880
        %v882 = vpop.f32.mrb[0].mxu0
        %883 = vmatprep.mubr.f32.mxu0 0.0
        %884 = vmatmul.mubr.f32.gmra.mrb[0].mxu0 %v802
        %v885 = vpop.f32.mrb[0].mxu0
        %v886 = vadd.f32 0.0, %v885
        %v887 = vpop.f32.mrb[0].mxu0
        %888 = vdwg.mxu0
        %vm889 = vcmask 261120
        %890 = vst.msk [vmem:[%s283] sm:$0xff] %vm889, %v871
        %891 = vst.msk [vmem:[%s283 + $0x8] sm:$0xff] %vm889, %v876
        %892 = vst.msk [vmem:[%s283 + $0x10] sm:$0xff] %vm889, %v881
        %893 = vst.msk [vmem:[%s283 + $0x18] sm:$0xff] %vm889, %v886
        %894 = vmatprep.subr.mxu0 0.0
        %895 = vmatpush1.msra.mxu0 %v724
        %896 = vmatprep.subr.mxu0 0.0
        %897 = vmatpush1.msra.mxu0 %v729
        %898 = vmatprep.subr.mxu0 0.0
        %899 = vmatpush1.msra.mxu0 0.0
        %900 = vmatprep.subr.mxu0 0.0
        %901 = vmatpush1.msra.mxu0 0.0
        %902 = vmatprep.subr.mxu0 0.0
        %903 = vmatpush1.msra.mxu0 0.0
        %904 = vmatprep.subr.mxu0 0.0
        %905 = vmatpush1.msra.mxu0 0.0
        %906 = vmatprep.subr.mxu0 0.0
        %907 = vmatpush1.msra.mxu0 0.0
        %908 = vmatprep.subr.mxu0 0.0
        %909 = vmatpush1.msra.mxu0 0.0
        %910 = vmatprep.subr.mxu0 0.0
        %911 = vmatpush1.msra.mxu0 0.0
        %912 = vmatprep.subr.mxu0 0.0
        %913 = vmatpush1.msra.mxu0 0.0
        %914 = vmatprep.subr.mxu0 0.0
        %915 = vmatpush1.msra.mxu0 0.0
        %916 = vmatprep.subr.mxu0 0.0
        %917 = vmatpush1.msra.mxu0 0.0
        %918 = vmatprep.subr.mxu0 0.0
        %919 = vmatpush1.msra.mxu0 0.0
        %920 = vmatprep.subr.mxu0 0.0
        %921 = vmatpush1.msra.mxu0 0.0
        %922 = vmatprep.subr.mxu0 0.0
        %923 = vmatpush1.msra.mxu0 0.0
        %924 = vmatprep.subr.mxu0 0.0
        %925 = vmatpush1.msra.mxu0 0.0
        %926 = vmatprep.subr.mxu0 0.0
        %927 = vmatpush1.msra.mxu0 0.0
        %928 = vmatprep.subr.mxu0 0.0
        %929 = vmatpush1.msra.mxu0 0.0
        %930 = vmatprep.subr.mxu0 0.0
        %931 = vmatpush1.msra.mxu0 0.0
        %932 = vmatprep.subr.mxu0 0.0
        %933 = vmatpush1.msra.mxu0 0.0
        %934 = vmatprep.subr.mxu0 0.0
        %935 = vmatpush1.msra.mxu0 0.0
        %936 = vmatprep.subr.mxu0 0.0
        %937 = vmatpush1.msra.mxu0 0.0
        %938 = vmatprep.subr.mxu0 0.0
        %939 = vmatpush1.msra.mxu0 0.0
        %940 = vmatprep.subr.mxu0 0.0
        %941 = vmatpush1.msra.mxu0 0.0
        %942 = vmatprep.subr.mxu0 0.0
        %943 = vmatpush1.msra.mxu0 0.0
        %944 = vmatprep.subr.mxu0 0.0
        %945 = vmatpush1.msra.mxu0 0.0
        %946 = vmatprep.subr.mxu0 0.0
        %947 = vmatpush1.msra.mxu0 0.0
        %948 = vmatprep.subr.mxu0 0.0
        %949 = vmatpush1.msra.mxu0 0.0
        %950 = vmatprep.subr.mxu0 0.0
        %951 = vmatpush1.msra.mxu0 0.0
        %952 = vmatprep.subr.mxu0 0.0
        %953 = vmatpush1.msra.mxu0 0.0
        %954 = vmatprep.subr.mxu0 0.0
        %955 = vmatpush1.msra.mxu0 0.0
        %956 = vmatprep.subr.mxu0 0.0
        %957 = vmatpush1.msra.mxu0 0.0
        %958 = vmatprep.mubr.f32.mxu0 0.0
        %959 = vmatmul.mubr.f32.gmra.mrb[0].mxu0 %v793
        %v960 = vpop.f32.mrb[0].mxu0
        %v961 = vadd.f32 0.0, %v960
        %v962 = vpop.f32.mrb[0].mxu0
        %963 = vmatprep.mubr.f32.mxu0 0.0
        %964 = vmatmul.mubr.f32.gmra.mrb[0].mxu0 %v796
        %v965 = vpop.f32.mrb[0].mxu0
        %v966 = vadd.f32 0.0, %v965
        %v967 = vpop.f32.mrb[0].mxu0
        %968 = vmatprep.mubr.f32.mxu0 0.0
        %969 = vmatmul.mubr.f32.gmra.mrb[0].mxu0 %v799
        %v970 = vpop.f32.mrb[0].mxu0
        %v971 = vadd.f32 0.0, %v970
        %v972 = vpop.f32.mrb[0].mxu0
        %973 = vmatprep.mubr.f32.mxu0 0.0
        %974 = vmatmul.mubr.f32.gmra.mrb[0].mxu0 %v802
        %v975 = vpop.f32.mrb[0].mxu0
        %v976 = vadd.f32 0.0, %v975
        %v977 = vpop.f32.mrb[0].mxu0
        %978 = vdwg.mxu0
        %s979 = scalar_lea.vmem %s283, 32 [#allocation10]
        %980 = vst.msk [vmem:[%s979] sm:$0xff] %vm889, %v961
        %981 = vst.msk [vmem:[%s979 + $0x8] sm:$0xff] %vm889, %v966
        %982 = vst.msk [vmem:[%s979 + $0x10] sm:$0xff] %vm889, %v971
        %983 = vst.msk [vmem:[%s979 + $0x18] sm:$0xff] %vm889, %v976
        %984 = vmatprep.subr.mxu0 0.0
        %985 = vmatpush1.msra.mxu0 %v734
        %986 = vmatprep.subr.mxu0 0.0
        %987 = vmatpush1.msra.mxu0 %v739
        %988 = vmatprep.subr.mxu0 0.0
        %989 = vmatpush1.msra.mxu0 0.0
        %990 = vmatprep.subr.mxu0 0.0
        %991 = vmatpush1.msra.mxu0 0.0
        %992 = vmatprep.subr.mxu0 0.0
        %993 = vmatpush1.msra.mxu0 0.0
        %994 = vmatprep.subr.mxu0 0.0
        %995 = vmatpush1.msra.mxu0 0.0
        %996 = vmatprep.subr.mxu0 0.0
        %997 = vmatpush1.msra.mxu0 0.0
        %998 = vmatprep.subr.mxu0 0.0
        %999 = vmatpush1.msra.mxu0 0.0
        %1000 = vmatprep.subr.mxu0 0.0
        %1001 = vmatpush1.msra.mxu0 0.0
        %1002 = vmatprep.subr.mxu0 0.0
        %1003 = vmatpush1.msra.mxu0 0.0
        %1004 = vmatprep.subr.mxu0 0.0
        %1005 = vmatpush1.msra.mxu0 0.0
        %1006 = vmatprep.subr.mxu0 0.0
        %1007 = vmatpush1.msra.mxu0 0.0
        %1008 = vmatprep.subr.mxu0 0.0
        %1009 = vmatpush1.msra.mxu0 0.0
        %1010 = vmatprep.subr.mxu0 0.0
        %1011 = vmatpush1.msra.mxu0 0.0
        %1012 = vmatprep.subr.mxu0 0.0
        %1013 = vmatpush1.msra.mxu0 0.0
        %1014 = vmatprep.subr.mxu0 0.0
        %1015 = vmatpush1.msra.mxu0 0.0
        %1016 = vmatprep.subr.mxu0 0.0
        %1017 = vmatpush1.msra.mxu0 0.0
        %1018 = vmatprep.subr.mxu0 0.0
        %1019 = vmatpush1.msra.mxu0 0.0
        %1020 = vmatprep.subr.mxu0 0.0
        %1021 = vmatpush1.msra.mxu0 0.0
        %1022 = vmatprep.subr.mxu0 0.0
        %1023 = vmatpush1.msra.mxu0 0.0
        %1024 = vmatprep.subr.mxu0 0.0
        %1025 = vmatpush1.msra.mxu0 0.0
        %1026 = vmatprep.subr.mxu0 0.0
        %1027 = vmatpush1.msra.mxu0 0.0
        %1028 = vmatprep.subr.mxu0 0.0
        %1029 = vmatpush1.msra.mxu0 0.0
        %1030 = vmatprep.subr.mxu0 0.0
        %1031 = vmatpush1.msra.mxu0 0.0
        %1032 = vmatprep.subr.mxu0 0.0
        %1033 = vmatpush1.msra.mxu0 0.0
        %1034 = vmatprep.subr.mxu0 0.0
        %1035 = vmatpush1.msra.mxu0 0.0
        %1036 = vmatprep.subr.mxu0 0.0
        %1037 = vmatpush1.msra.mxu0 0.0
        %1038 = vmatprep.subr.mxu0 0.0
        %1039 = vmatpush1.msra.mxu0 0.0
        %1040 = vmatprep.subr.mxu0 0.0
        %1041 = vmatpush1.msra.mxu0 0.0
        %1042 = vmatprep.subr.mxu0 0.0
        %1043 = vmatpush1.msra.mxu0 0.0
        %1044 = vmatprep.subr.mxu0 0.0
        %1045 = vmatpush1.msra.mxu0 0.0
        %1046 = vmatprep.subr.mxu0 0.0
        %1047 = vmatpush1.msra.mxu0 0.0
        %1048 = vmatprep.mubr.f32.mxu0 0.0
        %1049 = vmatmul.mubr.f32.gmra.mrb[0].mxu0 %v793
        %v1050 = vpop.f32.mrb[0].mxu0
        %v1051 = vadd.f32 0.0, %v1050
        %v1052 = vpop.f32.mrb[0].mxu0
        %1053 = vmatprep.mubr.f32.mxu0 0.0
        %1054 = vmatmul.mubr.f32.gmra.mrb[0].mxu0 %v796
        %v1055 = vpop.f32.mrb[0].mxu0
        %v1056 = vadd.f32 0.0, %v1055
        %v1057 = vpop.f32.mrb[0].mxu0
        %1058 = vmatprep.mubr.f32.mxu0 0.0
        %1059 = vmatmul.mubr.f32.gmra.mrb[0].mxu0 %v799
        %v1060 = vpop.f32.mrb[0].mxu0
        %v1061 = vadd.f32 0.0, %v1060
        %v1062 = vpop.f32.mrb[0].mxu0
        %1063 = vmatprep.mubr.f32.mxu0 0.0
        %1064 = vmatmul.mubr.f32.gmra.mrb[0].mxu0 %v802
        %v1065 = vpop.f32.mrb[0].mxu0
        %v1066 = vadd.f32 0.0, %v1065
        %v1067 = vpop.f32.mrb[0].mxu0
        %1068 = vdwg.mxu0
        %s1069 = scalar_lea.vmem %s283, 64 [#allocation10]
        %1070 = vst.msk [vmem:[%s1069] sm:$0xff] %vm889, %v1051
        %1071 = vst.msk [vmem:[%s1069 + $0x8] sm:$0xff] %vm889, %v1056
        %1072 = vst.msk [vmem:[%s1069 + $0x10] sm:$0xff] %vm889, %v1061
        %1073 = vst.msk [vmem:[%s1069 + $0x18] sm:$0xff] %vm889, %v1066
        %1074 = vmatprep.subr.mxu0 0.0
        %1075 = vmatpush1.msra.mxu0 %v744
        %1076 = vmatprep.subr.mxu0 0.0
        %1077 = vmatpush1.msra.mxu0 %v749
        %1078 = vmatprep.subr.mxu0 0.0
        %1079 = vmatpush1.msra.mxu0 0.0
        %1080 = vmatprep.subr.mxu0 0.0
        %1081 = vmatpush1.msra.mxu0 0.0
        %1082 = vmatprep.subr.mxu0 0.0
        %1083 = vmatpush1.msra.mxu0 0.0
        %1084 = vmatprep.subr.mxu0 0.0
        %1085 = vmatpush1.msra.mxu0 0.0
        %1086 = vmatprep.subr.mxu0 0.0
        %1087 = vmatpush1.msra.mxu0 0.0
        %1088 = vmatprep.subr.mxu0 0.0
        %1089 = vmatpush1.msra.mxu0 0.0
        %1090 = vmatprep.subr.mxu0 0.0
        %1091 = vmatpush1.msra.mxu0 0.0
        %1092 = vmatprep.subr.mxu0 0.0
        %1093 = vmatpush1.msra.mxu0 0.0
        %1094 = vmatprep.subr.mxu0 0.0
        %1095 = vmatpush1.msra.mxu0 0.0
        %1096 = vmatprep.subr.mxu0 0.0
        %1097 = vmatpush1.msra.mxu0 0.0
        %1098 = vmatprep.subr.mxu0 0.0
        %1099 = vmatpush1.msra.mxu0 0.0
        %1100 = vmatprep.subr.mxu0 0.0
        %1101 = vmatpush1.msra.mxu0 0.0
        %1102 = vmatprep.subr.mxu0 0.0
        %1103 = vmatpush1.msra.mxu0 0.0
        %1104 = vmatprep.subr.mxu0 0.0
        %1105 = vmatpush1.msra.mxu0 0.0
        %1106 = vmatprep.subr.mxu0 0.0
        %1107 = vmatpush1.msra.mxu0 0.0
        %1108 = vmatprep.subr.mxu0 0.0
        %1109 = vmatpush1.msra.mxu0 0.0
        %1110 = vmatprep.subr.mxu0 0.0
        %1111 = vmatpush1.msra.mxu0 0.0
        %1112 = vmatprep.subr.mxu0 0.0
        %1113 = vmatpush1.msra.mxu0 0.0
        %1114 = vmatprep.subr.mxu0 0.0
        %1115 = vmatpush1.msra.mxu0 0.0
        %1116 = vmatprep.subr.mxu0 0.0
        %1117 = vmatpush1.msra.mxu0 0.0
        %1118 = vmatprep.subr.mxu0 0.0
        %1119 = vmatpush1.msra.mxu0 0.0
        %1120 = vmatprep.subr.mxu0 0.0
        %1121 = vmatpush1.msra.mxu0 0.0
        %1122 = vmatprep.subr.mxu0 0.0
        %1123 = vmatpush1.msra.mxu0 0.0
        %1124 = vmatprep.subr.mxu0 0.0
        %1125 = vmatpush1.msra.mxu0 0.0
        %1126 = vmatprep.subr.mxu0 0.0
        %1127 = vmatpush1.msra.mxu0 0.0
        %1128 = vmatprep.subr.mxu0 0.0
        %1129 = vmatpush1.msra.mxu0 0.0
        %1130 = vmatprep.subr.mxu0 0.0
        %1131 = vmatpush1.msra.mxu0 0.0
        %1132 = vmatprep.subr.mxu0 0.0
        %1133 = vmatpush1.msra.mxu0 0.0
        %1134 = vmatprep.subr.mxu0 0.0
        %1135 = vmatpush1.msra.mxu0 0.0
        %1136 = vmatprep.subr.mxu0 0.0
        %1137 = vmatpush1.msra.mxu0 0.0
        %1138 = vmatprep.mubr.f32.mxu0 0.0
        %1139 = vmatmul.mubr.f32.gmra.mrb[0].mxu0 %v793
        %v1140 = vpop.f32.mrb[0].mxu0
        %v1141 = vadd.f32 0.0, %v1140
        %v1142 = vpop.f32.mrb[0].mxu0
        %1143 = vmatprep.mubr.f32.mxu0 0.0
        %1144 = vmatmul.mubr.f32.gmra.mrb[0].mxu0 %v796
        %v1145 = vpop.f32.mrb[0].mxu0
        %v1146 = vadd.f32 0.0, %v1145
        %v1147 = vpop.f32.mrb[0].mxu0
        %1148 = vmatprep.mubr.f32.mxu0 0.0
        %1149 = vmatmul.mubr.f32.gmra.mrb[0].mxu0 %v799
        %v1150 = vpop.f32.mrb[0].mxu0
        %v1151 = vadd.f32 0.0, %v1150
        %v1152 = vpop.f32.mrb[0].mxu0
        %1153 = vmatprep.mubr.f32.mxu0 0.0
        %1154 = vmatmul.mubr.f32.gmra.mrb[0].mxu0 %v802
        %v1155 = vpop.f32.mrb[0].mxu0
        %v1156 = vadd.f32 0.0, %v1155
        %v1157 = vpop.f32.mrb[0].mxu0
        %1158 = vdwg.mxu0
        %s1159 = scalar_lea.vmem %s283, 96 [#allocation10]
        %1160 = vst.msk [vmem:[%s1159] sm:$0xff] %vm889, %v1141
        %1161 = vst.msk [vmem:[%s1159 + $0x8] sm:$0xff] %vm889, %v1146
        %1162 = vst.msk [vmem:[%s1159 + $0x10] sm:$0xff] %vm889, %v1151
        %1163 = vst.msk [vmem:[%s1159 + $0x18] sm:$0xff] %vm889, %v1156
        %1164 = vmatprep.subr.mxu0 0.0
        %1165 = vmatpush1.msra.mxu0 %v754
        %1166 = vmatprep.subr.mxu0 0.0
        %1167 = vmatpush1.msra.mxu0 %v759
        %1168 = vmatprep.subr.mxu0 0.0
        %1169 = vmatpush1.msra.mxu0 0.0
        %1170 = vmatprep.subr.mxu0 0.0
        %1171 = vmatpush1.msra.mxu0 0.0
        %1172 = vmatprep.subr.mxu0 0.0
        %1173 = vmatpush1.msra.mxu0 0.0
        %1174 = vmatprep.subr.mxu0 0.0
        %1175 = vmatpush1.msra.mxu0 0.0
        %1176 = vmatprep.subr.mxu0 0.0
        %1177 = vmatpush1.msra.mxu0 0.0
        %1178 = vmatprep.subr.mxu0 0.0
        %1179 = vmatpush1.msra.mxu0 0.0
        %1180 = vmatprep.subr.mxu0 0.0
        %1181 = vmatpush1.msra.mxu0 0.0
        %1182 = vmatprep.subr.mxu0 0.0
        %1183 = vmatpush1.msra.mxu0 0.0
        %1184 = vmatprep.subr.mxu0 0.0
        %1185 = vmatpush1.msra.mxu0 0.0
        %1186 = vmatprep.subr.mxu0 0.0
        %1187 = vmatpush1.msra.mxu0 0.0
        %1188 = vmatprep.subr.mxu0 0.0
        %1189 = vmatpush1.msra.mxu0 0.0
        %1190 = vmatprep.subr.mxu0 0.0
        %1191 = vmatpush1.msra.mxu0 0.0
        %1192 = vmatprep.subr.mxu0 0.0
        %1193 = vmatpush1.msra.mxu0 0.0
        %1194 = vmatprep.subr.mxu0 0.0
        %1195 = vmatpush1.msra.mxu0 0.0
        %1196 = vmatprep.subr.mxu0 0.0
        %1197 = vmatpush1.msra.mxu0 0.0
        %1198 = vmatprep.subr.mxu0 0.0
        %1199 = vmatpush1.msra.mxu0 0.0
        %1200 = vmatprep.subr.mxu0 0.0
        %1201 = vmatpush1.msra.mxu0 0.0
        %1202 = vmatprep.subr.mxu0 0.0
        %1203 = vmatpush1.msra.mxu0 0.0
        %1204 = vmatprep.subr.mxu0 0.0
        %1205 = vmatpush1.msra.mxu0 0.0
        %1206 = vmatprep.subr.mxu0 0.0
        %1207 = vmatpush1.msra.mxu0 0.0
        %1208 = vmatprep.subr.mxu0 0.0
        %1209 = vmatpush1.msra.mxu0 0.0
        %1210 = vmatprep.subr.mxu0 0.0
        %1211 = vmatpush1.msra.mxu0 0.0
        %1212 = vmatprep.subr.mxu0 0.0
        %1213 = vmatpush1.msra.mxu0 0.0
        %1214 = vmatprep.subr.mxu0 0.0
        %1215 = vmatpush1.msra.mxu0 0.0
        %1216 = vmatprep.subr.mxu0 0.0
        %1217 = vmatpush1.msra.mxu0 0.0
        %1218 = vmatprep.subr.mxu0 0.0
        %1219 = vmatpush1.msra.mxu0 0.0
        %1220 = vmatprep.subr.mxu0 0.0
        %1221 = vmatpush1.msra.mxu0 0.0
        %1222 = vmatprep.subr.mxu0 0.0
        %1223 = vmatpush1.msra.mxu0 0.0
        %1224 = vmatprep.subr.mxu0 0.0
        %1225 = vmatpush1.msra.mxu0 0.0
        %1226 = vmatprep.subr.mxu0 0.0
        %1227 = vmatpush1.msra.mxu0 0.0
        %1228 = vmatprep.mubr.f32.mxu0 0.0
        %1229 = vmatmul.mubr.f32.gmra.mrb[0].mxu0 %v793
        %v1230 = vpop.f32.mrb[0].mxu0
        %v1231 = vadd.f32 0.0, %v1230
        %v1232 = vpop.f32.mrb[0].mxu0
        %1233 = vmatprep.mubr.f32.mxu0 0.0
        %1234 = vmatmul.mubr.f32.gmra.mrb[0].mxu0 %v796
        %v1235 = vpop.f32.mrb[0].mxu0
        %v1236 = vadd.f32 0.0, %v1235
        %v1237 = vpop.f32.mrb[0].mxu0
        %1238 = vmatprep.mubr.f32.mxu0 0.0
        %1239 = vmatmul.mubr.f32.gmra.mrb[0].mxu0 %v799
        %v1240 = vpop.f32.mrb[0].mxu0
        %v1241 = vadd.f32 0.0, %v1240
        %v1242 = vpop.f32.mrb[0].mxu0
        %1243 = vmatprep.mubr.f32.mxu0 0.0
        %1244 = vmatmul.mubr.f32.gmra.mrb[0].mxu0 %v802
        %v1245 = vpop.f32.mrb[0].mxu0
        %v1246 = vadd.f32 0.0, %v1245
        %v1247 = vpop.f32.mrb[0].mxu0
        %1248 = vdwg.mxu0
        %s1249 = scalar_lea.vmem %s283, 128 [#allocation10]
        %1250 = vst.msk [vmem:[%s1249] sm:$0xff] %vm889, %v1231
        %1251 = vst.msk [vmem:[%s1249 + $0x8] sm:$0xff] %vm889, %v1236
        %1252 = vst.msk [vmem:[%s1249 + $0x10] sm:$0xff] %vm889, %v1241
        %1253 = vst.msk [vmem:[%s1249 + $0x18] sm:$0xff] %vm889, %v1246
        %1254 = vmatprep.subr.mxu0 0.0
        %1255 = vmatpush1.msra.mxu0 %v764
        %1256 = vmatprep.subr.mxu0 0.0
        %1257 = vmatpush1.msra.mxu0 %v769
        %1258 = vmatprep.subr.mxu0 0.0
        %1259 = vmatpush1.msra.mxu0 0.0
        %1260 = vmatprep.subr.mxu0 0.0
        %1261 = vmatpush1.msra.mxu0 0.0
        %1262 = vmatprep.subr.mxu0 0.0
        %1263 = vmatpush1.msra.mxu0 0.0
        %1264 = vmatprep.subr.mxu0 0.0
        %1265 = vmatpush1.msra.mxu0 0.0
        %1266 = vmatprep.subr.mxu0 0.0
        %1267 = vmatpush1.msra.mxu0 0.0
        %1268 = vmatprep.subr.mxu0 0.0
        %1269 = vmatpush1.msra.mxu0 0.0
        %1270 = vmatprep.subr.mxu0 0.0
        %1271 = vmatpush1.msra.mxu0 0.0
        %1272 = vmatprep.subr.mxu0 0.0
        %1273 = vmatpush1.msra.mxu0 0.0
        %1274 = vmatprep.subr.mxu0 0.0
        %1275 = vmatpush1.msra.mxu0 0.0
        %1276 = vmatprep.subr.mxu0 0.0
        %1277 = vmatpush1.msra.mxu0 0.0
        %1278 = vmatprep.subr.mxu0 0.0
        %1279 = vmatpush1.msra.mxu0 0.0
        %1280 = vmatprep.subr.mxu0 0.0
        %1281 = vmatpush1.msra.mxu0 0.0
        %1282 = vmatprep.subr.mxu0 0.0
        %1283 = vmatpush1.msra.mxu0 0.0
        %1284 = vmatprep.subr.mxu0 0.0
        %1285 = vmatpush1.msra.mxu0 0.0
        %1286 = vmatprep.subr.mxu0 0.0
        %1287 = vmatpush1.msra.mxu0 0.0
        %1288 = vmatprep.subr.mxu0 0.0
        %1289 = vmatpush1.msra.mxu0 0.0
        %1290 = vmatprep.subr.mxu0 0.0
        %1291 = vmatpush1.msra.mxu0 0.0
        %1292 = vmatprep.subr.mxu0 0.0
        %1293 = vmatpush1.msra.mxu0 0.0
        %1294 = vmatprep.subr.mxu0 0.0
        %1295 = vmatpush1.msra.mxu0 0.0
        %1296 = vmatprep.subr.mxu0 0.0
        %1297 = vmatpush1.msra.mxu0 0.0
        %1298 = vmatprep.subr.mxu0 0.0
        %1299 = vmatpush1.msra.mxu0 0.0
        %1300 = vmatprep.subr.mxu0 0.0
        %1301 = vmatpush1.msra.mxu0 0.0
        %1302 = vmatprep.subr.mxu0 0.0
        %1303 = vmatpush1.msra.mxu0 0.0
        %1304 = vmatprep.subr.mxu0 0.0
        %1305 = vmatpush1.msra.mxu0 0.0
        %1306 = vmatprep.subr.mxu0 0.0
        %1307 = vmatpush1.msra.mxu0 0.0
        %1308 = vmatprep.subr.mxu0 0.0
        %1309 = vmatpush1.msra.mxu0 0.0
        %1310 = vmatprep.subr.mxu0 0.0
        %1311 = vmatpush1.msra.mxu0 0.0
        %1312 = vmatprep.subr.mxu0 0.0
        %1313 = vmatpush1.msra.mxu0 0.0
        %1314 = vmatprep.subr.mxu0 0.0
        %1315 = vmatpush1.msra.mxu0 0.0
        %1316 = vmatprep.subr.mxu0 0.0
        %1317 = vmatpush1.msra.mxu0 0.0
        %1318 = vmatprep.mubr.f32.mxu0 0.0
        %1319 = vmatmul.mubr.f32.gmra.mrb[0].mxu0 %v793
        %v1320 = vpop.f32.mrb[0].mxu0
        %v1321 = vadd.f32 0.0, %v1320
        %v1322 = vpop.f32.mrb[0].mxu0
        %1323 = vmatprep.mubr.f32.mxu0 0.0
        %1324 = vmatmul.mubr.f32.gmra.mrb[0].mxu0 %v796
        %v1325 = vpop.f32.mrb[0].mxu0
        %v1326 = vadd.f32 0.0, %v1325
        %v1327 = vpop.f32.mrb[0].mxu0
        %1328 = vmatprep.mubr.f32.mxu0 0.0
        %1329 = vmatmul.mubr.f32.gmra.mrb[0].mxu0 %v799
        %v1330 = vpop.f32.mrb[0].mxu0
        %v1331 = vadd.f32 0.0, %v1330
        %v1332 = vpop.f32.mrb[0].mxu0
        %1333 = vmatprep.mubr.f32.mxu0 0.0
        %1334 = vmatmul.mubr.f32.gmra.mrb[0].mxu0 %v802
        %v1335 = vpop.f32.mrb[0].mxu0
        %v1336 = vadd.f32 0.0, %v1335
        %v1337 = vpop.f32.mrb[0].mxu0
        %1338 = vdwg.mxu0
        %s1339 = scalar_lea.vmem %s283, 160 [#allocation10]
        %1340 = vst.msk [vmem:[%s1339] sm:$0xff] %vm889, %v1321
        %1341 = vst.msk [vmem:[%s1339 + $0x8] sm:$0xff] %vm889, %v1326
        %1342 = vst.msk [vmem:[%s1339 + $0x10] sm:$0xff] %vm889, %v1331
        %1343 = vst.msk [vmem:[%s1339 + $0x18] sm:$0xff] %vm889, %v1336
        %1344 = vmatprep.subr.mxu0 0.0
        %1345 = vmatpush1.msra.mxu0 %v774
        %1346 = vmatprep.subr.mxu0 0.0
        %1347 = vmatpush1.msra.mxu0 %v779
        %1348 = vmatprep.subr.mxu0 0.0
        %1349 = vmatpush1.msra.mxu0 0.0
        %1350 = vmatprep.subr.mxu0 0.0
        %1351 = vmatpush1.msra.mxu0 0.0
        %1352 = vmatprep.subr.mxu0 0.0
        %1353 = vmatpush1.msra.mxu0 0.0
        %1354 = vmatprep.subr.mxu0 0.0
        %1355 = vmatpush1.msra.mxu0 0.0
        %1356 = vmatprep.subr.mxu0 0.0
        %1357 = vmatpush1.msra.mxu0 0.0
        %1358 = vmatprep.subr.mxu0 0.0
        %1359 = vmatpush1.msra.mxu0 0.0
        %1360 = vmatprep.subr.mxu0 0.0
        %1361 = vmatpush1.msra.mxu0 0.0
        %1362 = vmatprep.subr.mxu0 0.0
        %1363 = vmatpush1.msra.mxu0 0.0
        %1364 = vmatprep.subr.mxu0 0.0
        %1365 = vmatpush1.msra.mxu0 0.0
        %1366 = vmatprep.subr.mxu0 0.0
        %1367 = vmatpush1.msra.mxu0 0.0
        %1368 = vmatprep.subr.mxu0 0.0
        %1369 = vmatpush1.msra.mxu0 0.0
        %1370 = vmatprep.subr.mxu0 0.0
        %1371 = vmatpush1.msra.mxu0 0.0
        %1372 = vmatprep.subr.mxu0 0.0
        %1373 = vmatpush1.msra.mxu0 0.0
        %1374 = vmatprep.subr.mxu0 0.0
        %1375 = vmatpush1.msra.mxu0 0.0
        %1376 = vmatprep.subr.mxu0 0.0
        %1377 = vmatpush1.msra.mxu0 0.0
        %1378 = vmatprep.subr.mxu0 0.0
        %1379 = vmatpush1.msra.mxu0 0.0
        %1380 = vmatprep.subr.mxu0 0.0
        %1381 = vmatpush1.msra.mxu0 0.0
        %1382 = vmatprep.subr.mxu0 0.0
        %1383 = vmatpush1.msra.mxu0 0.0
        %1384 = vmatprep.subr.mxu0 0.0
        %1385 = vmatpush1.msra.mxu0 0.0
        %1386 = vmatprep.subr.mxu0 0.0
        %1387 = vmatpush1.msra.mxu0 0.0
        %1388 = vmatprep.subr.mxu0 0.0
        %1389 = vmatpush1.msra.mxu0 0.0
        %1390 = vmatprep.subr.mxu0 0.0
        %1391 = vmatpush1.msra.mxu0 0.0
        %1392 = vmatprep.subr.mxu0 0.0
        %1393 = vmatpush1.msra.mxu0 0.0
        %1394 = vmatprep.subr.mxu0 0.0
        %1395 = vmatpush1.msra.mxu0 0.0
        %1396 = vmatprep.subr.mxu0 0.0
        %1397 = vmatpush1.msra.mxu0 0.0
        %1398 = vmatprep.subr.mxu0 0.0
        %1399 = vmatpush1.msra.mxu0 0.0
        %1400 = vmatprep.subr.mxu0 0.0
        %1401 = vmatpush1.msra.mxu0 0.0
        %1402 = vmatprep.subr.mxu0 0.0
        %1403 = vmatpush1.msra.mxu0 0.0
        %1404 = vmatprep.subr.mxu0 0.0
        %1405 = vmatpush1.msra.mxu0 0.0
        %1406 = vmatprep.subr.mxu0 0.0
        %1407 = vmatpush1.msra.mxu0 0.0
        %1408 = vmatprep.mubr.f32.mxu0 0.0
        %1409 = vmatmul.mubr.f32.gmra.mrb[0].mxu0 %v793
        %v1410 = vpop.f32.mrb[0].mxu0
        %v1411 = vadd.f32 0.0, %v1410
        %v1412 = vpop.f32.mrb[0].mxu0
        %1413 = vmatprep.mubr.f32.mxu0 0.0
        %1414 = vmatmul.mubr.f32.gmra.mrb[0].mxu0 %v796
        %v1415 = vpop.f32.mrb[0].mxu0
        %v1416 = vadd.f32 0.0, %v1415
        %v1417 = vpop.f32.mrb[0].mxu0
        %1418 = vmatprep.mubr.f32.mxu0 0.0
        %1419 = vmatmul.mubr.f32.gmra.mrb[0].mxu0 %v799
        %v1420 = vpop.f32.mrb[0].mxu0
        %v1421 = vadd.f32 0.0, %v1420
        %v1422 = vpop.f32.mrb[0].mxu0
        %1423 = vmatprep.mubr.f32.mxu0 0.0
        %1424 = vmatmul.mubr.f32.gmra.mrb[0].mxu0 %v802
        %v1425 = vpop.f32.mrb[0].mxu0
        %v1426 = vadd.f32 0.0, %v1425
        %v1427 = vpop.f32.mrb[0].mxu0
        %1428 = vdwg.mxu0
        %s1429 = scalar_lea.vmem %s283, 192 [#allocation10]
        %1430 = vst.msk [vmem:[%s1429] sm:$0xff] %vm889, %v1411
        %1431 = vst.msk [vmem:[%s1429 + $0x8] sm:$0xff] %vm889, %v1416
        %1432 = vst.msk [vmem:[%s1429 + $0x10] sm:$0xff] %vm889, %v1421
        %1433 = vst.msk [vmem:[%s1429 + $0x18] sm:$0xff] %vm889, %v1426
        %1434 = vmatprep.subr.mxu0 0.0
        %1435 = vmatpush1.msra.mxu0 %v784
        %1436 = vmatprep.subr.mxu0 0.0
        %1437 = vmatpush1.msra.mxu0 %v789
        %1438 = vmatprep.subr.mxu0 0.0
        %1439 = vmatpush1.msra.mxu0 0.0
        %1440 = vmatprep.subr.mxu0 0.0
        %1441 = vmatpush1.msra.mxu0 0.0
        %1442 = vmatprep.subr.mxu0 0.0
        %1443 = vmatpush1.msra.mxu0 0.0
        %1444 = vmatprep.subr.mxu0 0.0
        %1445 = vmatpush1.msra.mxu0 0.0
        %1446 = vmatprep.subr.mxu0 0.0
        %1447 = vmatpush1.msra.mxu0 0.0
        %1448 = vmatprep.subr.mxu0 0.0
        %1449 = vmatpush1.msra.mxu0 0.0
        %1450 = vmatprep.subr.mxu0 0.0
        %1451 = vmatpush1.msra.mxu0 0.0
        %1452 = vmatprep.subr.mxu0 0.0
        %1453 = vmatpush1.msra.mxu0 0.0
        %1454 = vmatprep.subr.mxu0 0.0
        %1455 = vmatpush1.msra.mxu0 0.0
        %1456 = vmatprep.subr.mxu0 0.0
        %1457 = vmatpush1.msra.mxu0 0.0
        %1458 = vmatprep.subr.mxu0 0.0
        %1459 = vmatpush1.msra.mxu0 0.0
        %1460 = vmatprep.subr.mxu0 0.0
        %1461 = vmatpush1.msra.mxu0 0.0
        %1462 = vmatprep.subr.mxu0 0.0
        %1463 = vmatpush1.msra.mxu0 0.0
        %1464 = vmatprep.subr.mxu0 0.0
        %1465 = vmatpush1.msra.mxu0 0.0
        %1466 = vmatprep.subr.mxu0 0.0
        %1467 = vmatpush1.msra.mxu0 0.0
        %1468 = vmatprep.subr.mxu0 0.0
        %1469 = vmatpush1.msra.mxu0 0.0
        %1470 = vmatprep.subr.mxu0 0.0
        %1471 = vmatpush1.msra.mxu0 0.0
        %1472 = vmatprep.subr.mxu0 0.0
        %1473 = vmatpush1.msra.mxu0 0.0
        %1474 = vmatprep.subr.mxu0 0.0
        %1475 = vmatpush1.msra.mxu0 0.0
        %1476 = vmatprep.subr.mxu0 0.0
        %1477 = vmatpush1.msra.mxu0 0.0
        %1478 = vmatprep.subr.mxu0 0.0
        %1479 = vmatpush1.msra.mxu0 0.0
        %1480 = vmatprep.subr.mxu0 0.0
        %1481 = vmatpush1.msra.mxu0 0.0
        %1482 = vmatprep.subr.mxu0 0.0
        %1483 = vmatpush1.msra.mxu0 0.0
        %1484 = vmatprep.subr.mxu0 0.0
        %1485 = vmatpush1.msra.mxu0 0.0
        %1486 = vmatprep.subr.mxu0 0.0
        %1487 = vmatpush1.msra.mxu0 0.0
        %1488 = vmatprep.subr.mxu0 0.0
        %1489 = vmatpush1.msra.mxu0 0.0
        %1490 = vmatprep.subr.mxu0 0.0
        %1491 = vmatpush1.msra.mxu0 0.0
        %1492 = vmatprep.subr.mxu0 0.0
        %1493 = vmatpush1.msra.mxu0 0.0
        %1494 = vmatprep.subr.mxu0 0.0
        %1495 = vmatpush1.msra.mxu0 0.0
        %1496 = vmatprep.subr.mxu0 0.0
        %1497 = vmatpush1.msra.mxu0 0.0
        %1498 = vmatprep.mubr.f32.mxu0 0.0
        %1499 = vmatmul.mubr.f32.gmra.mrb[0].mxu0 %v793
        %v1500 = vpop.f32.mrb[0].mxu0
        %v1501 = vadd.f32 0.0, %v1500
        %v1502 = vpop.f32.mrb[0].mxu0
        %1503 = vmatprep.mubr.f32.mxu0 0.0
        %1504 = vmatmul.mubr.f32.gmra.mrb[0].mxu0 %v796
        %v1505 = vpop.f32.mrb[0].mxu0
        %v1506 = vadd.f32 0.0, %v1505
        %v1507 = vpop.f32.mrb[0].mxu0
        %1508 = vmatprep.mubr.f32.mxu0 0.0
        %1509 = vmatmul.mubr.f32.gmra.mrb[0].mxu0 %v799
        %v1510 = vpop.f32.mrb[0].mxu0
        %v1511 = vadd.f32 0.0, %v1510
        %v1512 = vpop.f32.mrb[0].mxu0
        %1513 = vmatprep.mubr.f32.mxu0 0.0
        %1514 = vmatmul.mubr.f32.gmra.mrb[0].mxu0 %v802
        %v1515 = vpop.f32.mrb[0].mxu0
        %v1516 = vadd.f32 0.0, %v1515
        %v1517 = vpop.f32.mrb[0].mxu0
        %1518 = vdwg.mxu0
        %s1519 = scalar_lea.vmem %s283, 224 [#allocation10]
        %1520 = vst.msk [vmem:[%s1519] sm:$0xff] %vm889, %v1501
        %1521 = vst.msk [vmem:[%s1519 + $0x8] sm:$0xff] %vm889, %v1506
        %1522 = vst.msk [vmem:[%s1519 + $0x10] sm:$0xff] %vm889, %v1511
        %1523 = vst.msk [vmem:[%s1519 + $0x18] sm:$0xff] %vm889, %v1516
        %s1524 = sand.u32 %s156, 1
        %s1525 = scalar_lea.sflag [#allocation5], %s1524
        %s1526 = sand.u32 %s156, 1
        %s1527 = smul.addr %s1526, 256
        %s1528 = scalar_lea.vmem [#allocation10], %s1527
        // Predicated region
        $region53: #{tpu_custom_call.1} parent=39 // pred_check
          %p1529 = pneg %p166
        $region54: #{tpu_custom_call.1} parent=39 // pred_check_branch
          %1531 = sbr.rel (%p1529) target = $region56
        $region55: #{tpu_custom_call.1} parent=39 // pred_region
          %s1532 = smul.u32 8, %s29
          %s1534 = ssub.s32 4096, 4096
          %1535 = vsyncadd %s1525, %s1534
          %s1536 = smul.addr %s1532, 4
          %s1537 = smul.addr %s28, 32
          %s1538 = sadd.s32 %s1536, %s1537
          %s1539 = smul.addr %s1538, 128
          %s1540 = scalar_lea.hbm %s5, %s1539
          %s1541 = sshll.u32 %s1528, 4
          %s1542 = int_to_ptr.vmem [resolvable:$true] %s1541
          %1547 = dma.vmem_to_hbm [thread:$0]  %s1542, 4096, %s1540, %s1525, 128, 128, 8
        $region56: #{tpu_custom_call.1} parent=39 // pred_fallthru
          _
      $region40: #{tpu_custom_call.1} parent=5 // pred_fallthru
        _
      %p1548 = scmp.le.s32.totalorder 2, %s19
      // Predicated region
      $region57: #{tpu_custom_call.1} parent=5 // pred_check
        %p1549 = pneg %p1548
      $region58: #{tpu_custom_call.1} parent=5 // pred_check_branch
        %1551 = sbr.rel (%p1549) target = $region60
      $region59: #{tpu_custom_call.1} parent=5 // pred_region
        %s1552 = ssub.s32 %s19, 2
        // Predicated region
        $region61: #{tpu_custom_call.1} parent=59 // pred_check
          %p1553 = pneg %p172
        $region62: #{tpu_custom_call.1} parent=59 // pred_check_branch
          %1555 = sbr.rel (%p1553) target = $region64
        $region63: #{tpu_custom_call.1} parent=59 // pred_region
          %s1556 = sand.u32 %s157, 1
          %s1557 = scalar_lea.sflag [#allocation5], %s1556
          %s1558 = sand.u32 %s157, 1
          %s1559 = smul.addr %s1558, 256
          %s1560 = scalar_lea.vmem [#allocation10], %s1559
          %1561 = dma.done %s1557, 4096
        $region64: #{tpu_custom_call.1} parent=59 // pred_fallthru
          _
      $region60: #{tpu_custom_call.1} parent=5 // pred_fallthru
        _
    $region6: #{tpu_custom_call.1} parent=1 // loop_footer
      %s23 = sadd.s32 1, %s19
    $region7: #{tpu_custom_call.1} parent=1 // loop_footer_branch
      %18 = sbr.rel target = $region3
    $region8: #{tpu_custom_call.1} parent=1 // loop_exit
      _
    %1562 = vsyncpa [#allocation4], 1
    %s1563 = scalar_lea.sflag [#allocation4], 1
    %1564 = vsyncpa %s1563, 1
    %1565 = vsyncpa [#allocation5], 1
    %s1566 = scalar_lea.sflag [#allocation5], 1
    %1567 = vsyncpa %s1566, 1
    %1568 = vsyncpa [#allocation6], 1
    %s1569 = scalar_lea.sflag [#allocation6], 1
    %1570 = vsyncpa %s1569, 1
    %1571 = vsyncpa [#allocation9], 1

</llo_original>
